<compile_context>
chip_gen: v7x
topology: tpu7x:2x2x1
jax: 0.10.0
libtpu: 0.0.40
codegen_flags: <defaults>
</compile_context>

<pallas_src>
import jax
import jax.numpy as jnp
from jax import lax
from jax.experimental import pallas as pl
from jax.experimental.pallas import tpu as pltpu


def bigru_kernel(emb2_ref,                               # (T*B, E)
                 wif_ref, whf_ref, bgif_ref, bhnf_ref,   # fwd: (E,3Hd) (Hd,3Hd) (1,3Hd) (1,Hd)
                 wib_ref, whb_ref, bgib_ref, bhnb_ref,   # bwd: same shapes
                 h0_ref,                                 # (2, B, Hd)
                 out_ref,                                # (T, B, 2Hd)
                 hn_ref,                                 # (2, B, Hd)
                 gif_ref, gib_ref):                      # scratch: (T*B, 3Hd) each
    T = out_ref.shape[0]
    B = h0_ref.shape[1]
    Hd = h0_ref.shape[2]

    # --- Hoisted input projections: one matmul per direction over all timesteps.
    # Biases (b_ih + r/z part of b_hh) already folded into bgi* by the wrapper.
    emb2 = emb2_ref[...]
    gif_ref[...] = jnp.dot(emb2, wif_ref[...],
                           preferred_element_type=jnp.float32) + bgif_ref[...]
    gib_ref[...] = jnp.dot(emb2, wib_ref[...],
                           preferred_element_type=jnp.float32) + bgib_ref[...]

    wh_f = whf_ref[...]
    wh_b = whb_ref[...]
    # Pre-broadcast the remaining hidden-bias term once (outside the loop).
    bhn_f = jnp.broadcast_to(bhnf_ref[...], (B, Hd))
    bhn_b = jnp.broadcast_to(bhnb_ref[...], (B, Hd))

    def gru_step(gi, gh, bhn, h):
        # gi already contains b_ih (+ b_hr, b_hz); gh = h @ W_hh (no bias).
        rz = jax.nn.sigmoid(gi[:, :2 * Hd] + gh[:, :2 * Hd])
        r = rz[:, :Hd]
        z = rz[:, Hd:]
        n = jnp.tanh(gi[:, 2 * Hd:] + r * (gh[:, 2 * Hd:] + bhn))
        return (1.0 - z) * n + z * h

    # --- Interleaved forward/backward recurrence in a single (unrolled) loop.
    def body(i, carry):
        h_f, h_b = carry
        tb = T - 1 - i
        row_f = pl.multiple_of(i * B, B)
        row_b = pl.multiple_of(tb * B, B)
        gi_f = gif_ref[pl.ds(row_f, B), :]               # (B, 3Hd)
        gi_b = gib_ref[pl.ds(row_b, B), :]               # (B, 3Hd)
        gh_f = jnp.dot(h_f, wh_f, preferred_element_type=jnp.float32)
        gh_b = jnp.dot(h_b, wh_b, preferred_element_type=jnp.float32)
        h_f_new = gru_step(gi_f, gh_f, bhn_f, h_f)
        h_b_new = gru_step(gi_b, gh_b, bhn_b, h_b)
        out_ref[i, :, 0:Hd] = h_f_new                    # fused output: fwd half
        out_ref[tb, :, Hd:2 * Hd] = h_b_new              # fused output: bwd half
        return (h_f_new, h_b_new)

    h_f, h_b = lax.fori_loop(0, T, body, (h0_ref[0], h0_ref[1]), unroll=True)
    hn_ref[0] = h_f
    hn_ref[1] = h_b


def init_encoder_params(key, input_size, embedded_size, hidden_size):
    Hd = hidden_size // 2
    keys = jax.random.split(key, 12)
    k = 1.0 / jnp.sqrt(Hd)

    def uni(kk, shape):
        return jax.random.uniform(kk, shape, jnp.float32, -k, k)

    params = {
        # nn.Embedding(input_size, embedded_size): weight ~ N(0, 1)
        "embedding": jax.random.normal(keys[0], (input_size, embedded_size), jnp.float32),
        # GRU params, stored pre-transposed for x @ W form; gate order [r, z, n]:
        "w_ih_f": uni(keys[1], (embedded_size, 3 * Hd)),
        "w_hh_f": uni(keys[2], (Hd, 3 * Hd)),
        "b_ih_f": uni(keys[3], (1, 3 * Hd)),
        "b_hh_f": uni(keys[4], (1, 3 * Hd)),
        "w_ih_b": uni(keys[5], (embedded_size, 3 * Hd)),
        "w_hh_b": uni(keys[6], (Hd, 3 * Hd)),
        "b_ih_b": uni(keys[7], (1, 3 * Hd)),
        "b_hh_b": uni(keys[8], (1, 3 * Hd)),
        # init_hidden(): two randn tensors of shape (1, 1, Hd) -> stacked (2, 1, Hd)
        "h0": jax.random.normal(keys[9], (2, 1, Hd), jnp.float32),
    }
    return params


def encoder_forward(params, inputs):
    """inputs: (T, B) int32 token ids. Returns (output (T,B,H), hidden (2,B,Hd))."""
    emb = jnp.take(params["embedding"], inputs, axis=0)       # (T, B, E) embedding lookup
    # Dropout(p=0.0) is the identity at p=0 -> no-op.
    T, B, E = emb.shape
    Hd = params["h0"].shape[-1]
    H = 2 * Hd

    # Pad batch to a sublane multiple (8) so per-step vector ops/stores are dense.
    B_pad = -(-B // 8) * 8
    if B_pad != B:
        emb = jnp.pad(emb, ((0, 0), (0, B_pad - B), (0, 0)))
    emb2 = emb.reshape(T * B_pad, E)                          # layout plumbing only

    # original init_hidden assumes batch=1; broadcast initial hidden over batch.
    h0 = jnp.broadcast_to(params["h0"], (2, B_pad, Hd)).astype(jnp.float32)

    # Fold biases: gi gets b_ih + [b_hr, b_hz, 0]; the remaining b_hn stays separate
    # (it sits inside the r * (...) product and cannot be folded).
    def fold(b_ih, b_hh):
        bias_gi = b_ih + jnp.concatenate(
            [b_hh[:, :2 * Hd], jnp.zeros((1, Hd), jnp.float32)], axis=1)
        return bias_gi, b_hh[:, 2 * Hd:]

    bgi_f, bhn_f = fold(params["b_ih_f"], params["b_hh_f"])
    bgi_b, bhn_b = fold(params["b_ih_b"], params["b_hh_b"])

    vmem = pl.BlockSpec(memory_space=pltpu.MemorySpace.VMEM)
    out, hn = pl.pallas_call(
        bigru_kernel,
        out_shape=(
            jax.ShapeDtypeStruct((T, B_pad, H), jnp.float32),
            jax.ShapeDtypeStruct((2, B_pad, Hd), jnp.float32),
        ),
        in_specs=[vmem] * 10,
        out_specs=(vmem, vmem),
        scratch_shapes=[
            pltpu.VMEM((T * B_pad, 3 * Hd), jnp.float32),   # hoisted GI, forward
            pltpu.VMEM((T * B_pad, 3 * Hd), jnp.float32),   # hoisted GI, backward
        ],
    )(emb2,
      params["w_ih_f"], params["w_hh_f"], bgi_f, bhn_f,
      params["w_ih_b"], params["w_hh_b"], bgi_b, bhn_b,
      h0)

    return out[:, :B, :], hn[:, :B, :]


def _ref_gru_cell(x, h, w_ih, w_hh, b_ih, b_hh, Hd):
    """PyTorch GRUCell math, full-f32 precision (ground truth)."""
    gi = jnp.dot(x, w_ih, precision=lax.Precision.HIGHEST) + b_ih
    gh = jnp.dot(h, w_hh, precision=lax.Precision.HIGHEST) + b_hh
    i_r, i_z, i_n = gi[:, 0:Hd], gi[:, Hd:2 * Hd], gi[:, 2 * Hd:3 * Hd]
    h_r, h_z, h_n = gh[:, 0:Hd], gh[:, Hd:2 * Hd], gh[:, 2 * Hd:3 * Hd]
    r = jax.nn.sigmoid(i_r + h_r)
    z = jax.nn.sigmoid(i_z + h_z)
    n = jnp.tanh(i_n + r * h_n)
    return (1.0 - z) * n + z * h


def _ref_forward(params, inputs):
    """Pure-JAX reference (lax.scan, HIGHEST precision) for correctness checking."""
    emb = jnp.take(params["embedding"], inputs, axis=0)
    T, B, _ = emb.shape
    Hd = params["h0"].shape[-1]
    h0 = jnp.broadcast_to(params["h0"], (2, B, Hd)).astype(jnp.float32)

    def run_dir(h_init, wi, wh, bi, bh, reverse):
        def step(h, x):
            h_new = _ref_gru_cell(x, h, wi, wh, bi, bh, Hd)
            return h_new, h_new
        xs = emb[::-1] if reverse else emb
        h_last, ys = lax.scan(step, h_init, xs)
        if reverse:
            ys = ys[::-1]
        return ys, h_last

    ys_f, h_f = run_dir(h0[0], params["w_ih_f"], params["w_hh_f"],
                        params["b_ih_f"], params["b_hh_f"], False)
    ys_b, h_b = run_dir(h0[1], params["w_ih_b"], params["w_hh_b"],
                        params["b_ih_b"], params["b_hh_b"], True)
    return jnp.concatenate([ys_f, ys_b], axis=-1), jnp.stack([h_f, h_b], axis=0)


if __name__ == "__main__":
    # Small shapes: vocab=32, embedded_size=16, hidden_size=32 (Hd=16), seq=8, batch=2.
    INPUT_SIZE, EMBEDDED_SIZE, HIDDEN_SIZE = 32, 16, 32
    T, B = 8, 2

    key = jax.random.PRNGKey(0)
    k_par, k_in = jax.random.split(key)
    params = init_encoder_params(k_par, INPUT_SIZE, EMBEDDED_SIZE, HIDDEN_SIZE)
    inputs = jax.random.randint(k_in, (T, B), 0, INPUT_SIZE, dtype=jnp.int32)

    output, hidden = jax.jit(encoder_forward)(params, inputs)
    jax.block_until_ready((output, hidden))

    ref_out, ref_hid = _ref_forward(params, inputs)
    assert output.shape == (T, B, HIDDEN_SIZE) and hidden.shape == (2, B, HIDDEN_SIZE // 2)
    # Kernel uses default MXU precision (single-pass bf16 operands, f32 accumulate),
    # reference is full-f32 -> compare at a correspondingly relaxed tolerance.
    assert jnp.allclose(output, ref_out, atol=2e-2, rtol=2e-2)
    assert jnp.allclose(hidden, ref_hid, atol=2e-2, rtol=2e-2)

    print("KERNEL_OK")
</pallas_src>

<mosaic_0001>
module attributes {stable_mosaic.version = 11 : i64} {
  func.func @bigru_kernel(%arg0: memref<64x16xf32, #tpu.memory_space<vmem>>, %arg1: memref<16x48xf32, #tpu.memory_space<vmem>>, %arg2: memref<16x48xf32, #tpu.memory_space<vmem>>, %arg3: memref<1x48xf32, #tpu.memory_space<vmem>>, %arg4: memref<1x16xf32, #tpu.memory_space<vmem>>, %arg5: memref<16x48xf32, #tpu.memory_space<vmem>>, %arg6: memref<16x48xf32, #tpu.memory_space<vmem>>, %arg7: memref<1x48xf32, #tpu.memory_space<vmem>>, %arg8: memref<1x16xf32, #tpu.memory_space<vmem>>, %arg9: memref<2x8x16xf32, #tpu.memory_space<vmem>>, %arg10: memref<8x8x32xf32, #tpu.memory_space<vmem>>, %arg11: memref<2x8x16xf32, #tpu.memory_space<vmem>>, %arg12: memref<64x48xf32, #tpu.memory_space<vmem>>, %arg13: memref<64x48xf32, #tpu.memory_space<vmem>>) attributes {dimension_semantics = [], scalar_prefetch = 0 : i64, scratch_operands = 2 : i64, tpu.core_type = #tpu.core_type<tc>} {
    %c0 = arith.constant 0 : index
    %c0_0 = arith.constant 0 : index
    %0 = vector.load %arg0[%c0, %c0_0] : memref<64x16xf32, #tpu.memory_space<vmem>>, vector<64x16xf32>
    %c0_1 = arith.constant 0 : index
    %c0_2 = arith.constant 0 : index
    %1 = vector.load %arg1[%c0_1, %c0_2] : memref<16x48xf32, #tpu.memory_space<vmem>>, vector<16x48xf32>
    %cst = arith.constant dense<0.000000e+00> : vector<64x48xf32>
    %2 = tpu.matmul %0, %1, %cst {dimension_numbers = #tpu.dot_dimension_numbers<[1], [0], [0], [1], [0, 0, 1, 1], [], []>} : vector<64x16xf32>, vector<16x48xf32>, vector<64x48xf32> -> vector<64x48xf32>
    %c0_3 = arith.constant 0 : index
    %c0_4 = arith.constant 0 : index
    %3 = vector.load %arg3[%c0_3, %c0_4] : memref<1x48xf32, #tpu.memory_space<vmem>>, vector<1x48xf32>
    %4 = vector.broadcast %3 : vector<1x48xf32> to vector<64x48xf32>
    %5 = arith.addf %2, %4 : vector<64x48xf32>
    %c0_5 = arith.constant 0 : index
    %c0_6 = arith.constant 0 : index
    %6 = vector.load %arg12[%c0_5, %c0_6] : memref<64x48xf32, #tpu.memory_space<vmem>>, vector<64x48xf32>
    tpu.vector_store %arg12[%c0_5, %c0_6], %5 {strides = array<i32>} : memref<64x48xf32, #tpu.memory_space<vmem>>, vector<64x48xf32>,
    %c0_7 = arith.constant 0 : index
    %c0_8 = arith.constant 0 : index
    %7 = vector.load %arg5[%c0_7, %c0_8] : memref<16x48xf32, #tpu.memory_space<vmem>>, vector<16x48xf32>
    %cst_9 = arith.constant dense<0.000000e+00> : vector<64x48xf32>
    %8 = tpu.matmul %0, %7, %cst_9 {dimension_numbers = #tpu.dot_dimension_numbers<[1], [0], [0], [1], [0, 0, 1, 1], [], []>} : vector<64x16xf32>, vector<16x48xf32>, vector<64x48xf32> -> vector<64x48xf32>
    %c0_10 = arith.constant 0 : index
    %c0_11 = arith.constant 0 : index
    %9 = vector.load %arg7[%c0_10, %c0_11] : memref<1x48xf32, #tpu.memory_space<vmem>>, vector<1x48xf32>
    %10 = vector.broadcast %9 : vector<1x48xf32> to vector<64x48xf32>
    %11 = arith.addf %8, %10 : vector<64x48xf32>
    %c0_12 = arith.constant 0 : index
    %c0_13 = arith.constant 0 : index
    %12 = vector.load %arg13[%c0_12, %c0_13] : memref<64x48xf32, #tpu.memory_space<vmem>>, vector<64x48xf32>
    tpu.vector_store %arg13[%c0_12, %c0_13], %11 {strides = array<i32>} : memref<64x48xf32, #tpu.memory_space<vmem>>, vector<64x48xf32>,
    %c0_14 = arith.constant 0 : index
    %c0_15 = arith.constant 0 : index
    %13 = vector.load %arg2[%c0_14, %c0_15] : memref<16x48xf32, #tpu.memory_space<vmem>>, vector<16x48xf32>
    %c0_16 = arith.constant 0 : index
    %c0_17 = arith.constant 0 : index
    %14 = vector.load %arg6[%c0_16, %c0_17] : memref<16x48xf32, #tpu.memory_space<vmem>>, vector<16x48xf32>
    %c0_18 = arith.constant 0 : index
    %c0_19 = arith.constant 0 : index
    %15 = vector.load %arg4[%c0_18, %c0_19] : memref<1x16xf32, #tpu.memory_space<vmem>>, vector<1x16xf32>
    %16 = vector.shape_cast %15 : vector<1x16xf32> to vector<1x16xf32>
    %17 = vector.broadcast %16 : vector<1x16xf32> to vector<8x16xf32>
    %c0_20 = arith.constant 0 : index
    %c0_21 = arith.constant 0 : index
    %18 = vector.load %arg8[%c0_20, %c0_21] : memref<1x16xf32, #tpu.memory_space<vmem>>, vector<1x16xf32>
    %19 = vector.shape_cast %18 : vector<1x16xf32> to vector<1x16xf32>
    %20 = vector.broadcast %19 : vector<1x16xf32> to vector<8x16xf32>
    %c0_22 = arith.constant 0 : index
    %c0_23 = arith.constant 0 : index
    %c0_24 = arith.constant 0 : index
    %21 = vector.load %arg9[%c0_22, %c0_23, %c0_24] : memref<2x8x16xf32, #tpu.memory_space<vmem>>, vector<1x8x16xf32>
    %22 = vector.shape_cast %21 : vector<1x8x16xf32> to vector<8x16xf32>
    %c1 = arith.constant 1 : index
    %c0_25 = arith.constant 0 : index
    %c0_26 = arith.constant 0 : index
    %23 = vector.load %arg9[%c1, %c0_25, %c0_26] : memref<2x8x16xf32, #tpu.memory_space<vmem>>, vector<1x8x16xf32>
    %24 = vector.shape_cast %23 : vector<1x8x16xf32> to vector<8x16xf32>
    %c0_i32 = arith.constant 0 : i32
    %c7_i32 = arith.constant 7 : i32
    %25 = arith.subi %c7_i32, %c0_i32 : i32
    %c8_i32 = arith.constant 8 : i32
    %26 = arith.muli %c0_i32, %c8_i32 : i32
    %27 = tpu.assume_multiple %26, 8 : i32
    %c8_i32_27 = arith.constant 8 : i32
    %28 = arith.muli %25, %c8_i32_27 : i32
    %29 = tpu.assume_multiple %28, 8 : i32
    %30 = arith.index_cast %27 : i32 to index
    %c0_28 = arith.constant 0 : index
    %31 = vector.load %arg12[%30, %c0_28] : memref<64x48xf32, #tpu.memory_space<vmem>>, vector<8x48xf32>
    %32 = arith.index_cast %29 : i32 to index
    %c0_29 = arith.constant 0 : index
    %33 = vector.load %arg13[%32, %c0_29] : memref<64x48xf32, #tpu.memory_space<vmem>>, vector<8x48xf32>
    %cst_30 = arith.constant dense<0.000000e+00> : vector<8x48xf32>
    %34 = tpu.matmul %22, %13, %cst_30 {dimension_numbers = #tpu.dot_dimension_numbers<[1], [0], [0], [1], [0, 0, 1, 1], [], []>} : vector<8x16xf32>, vector<16x48xf32>, vector<8x48xf32> -> vector<8x48xf32>
    %cst_31 = arith.constant dense<0.000000e+00> : vector<8x48xf32>
    %35 = tpu.matmul %24, %14, %cst_31 {dimension_numbers = #tpu.dot_dimension_numbers<[1], [0], [0], [1], [0, 0, 1, 1], [], []>} : vector<8x16xf32>, vector<16x48xf32>, vector<8x48xf32> -> vector<8x48xf32>
    %36 = vector.extract_strided_slice %31 {offsets = [0, 0], sizes = [8, 32], strides = [1, 1]} : vector<8x48xf32> to vector<8x32xf32>
    %37 = vector.extract_strided_slice %34 {offsets = [0, 0], sizes = [8, 32], strides = [1, 1]} : vector<8x48xf32> to vector<8x32xf32>
    %38 = arith.addf %36, %37 : vector<8x32xf32>
    %39 = arith.negf %38 : vector<8x32xf32>
    %40 = math.exp %39 : vector<8x32xf32>
    %cst_32 = arith.constant 1.000000e+00 : f32
    %41 = vector.broadcast %cst_32 : f32 to vector<8x32xf32>
    %42 = arith.addf %41, %40 : vector<8x32xf32>
    %43 = arith.divf %41, %42 : vector<8x32xf32>
    %44 = vector.extract_strided_slice %43 {offsets = [0, 0], sizes = [8, 16], strides = [1, 1]} : vector<8x32xf32> to vector<8x16xf32>
    %45 = vector.extract_strided_slice %43 {offsets = [0, 16], sizes = [8, 16], strides = [1, 1]} : vector<8x32xf32> to vector<8x16xf32>
    %46 = vector.extract_strided_slice %31 {offsets = [0, 32], sizes = [8, 16], strides = [1, 1]} : vector<8x48xf32> to vector<8x16xf32>
    %47 = vector.extract_strided_slice %34 {offsets = [0, 32], sizes = [8, 16], strides = [1, 1]} : vector<8x48xf32> to vector<8x16xf32>
    %48 = arith.addf %47, %17 : vector<8x16xf32>
    %49 = arith.mulf %44, %48 : vector<8x16xf32>
    %50 = arith.addf %46, %49 : vector<8x16xf32>
    %51 = math.tanh %50 : vector<8x16xf32>
    %cst_33 = arith.constant 1.000000e+00 : f32
    %52 = vector.broadcast %cst_33 : f32 to vector<8x16xf32>
    %53 = arith.subf %52, %45 : vector<8x16xf32>
    %54 = arith.mulf %53, %51 : vector<8x16xf32>
    %55 = arith.mulf %45, %22 : vector<8x16xf32>
    %56 = arith.addf %54, %55 : vector<8x16xf32>
    %57 = vector.extract_strided_slice %33 {offsets = [0, 0], sizes = [8, 32], strides = [1, 1]} : vector<8x48xf32> to vector<8x32xf32>
    %58 = vector.extract_strided_slice %35 {offsets = [0, 0], sizes = [8, 32], strides = [1, 1]} : vector<8x48xf32> to vector<8x32xf32>
    %59 = arith.addf %57, %58 : vector<8x32xf32>
    %60 = arith.negf %59 : vector<8x32xf32>
    %61 = math.exp %60 : vector<8x32xf32>
    %cst_34 = arith.constant 1.000000e+00 : f32
    %62 = vector.broadcast %cst_34 : f32 to vector<8x32xf32>
    %63 = arith.addf %62, %61 : vector<8x32xf32>
    %64 = arith.divf %62, %63 : vector<8x32xf32>
    %65 = vector.extract_strided_slice %64 {offsets = [0, 0], sizes = [8, 16], strides = [1, 1]} : vector<8x32xf32> to vector<8x16xf32>
    %66 = vector.extract_strided_slice %64 {offsets = [0, 16], sizes = [8, 16], strides = [1, 1]} : vector<8x32xf32> to vector<8x16xf32>
    %67 = vector.extract_strided_slice %33 {offsets = [0, 32], sizes = [8, 16], strides = [1, 1]} : vector<8x48xf32> to vector<8x16xf32>
    %68 = vector.extract_strided_slice %35 {offsets = [0, 32], sizes = [8, 16], strides = [1, 1]} : vector<8x48xf32> to vector<8x16xf32>
    %69 = arith.addf %68, %20 : vector<8x16xf32>
    %70 = arith.mulf %65, %69 : vector<8x16xf32>
    %71 = arith.addf %67, %70 : vector<8x16xf32>
    %72 = math.tanh %71 : vector<8x16xf32>
    %cst_35 = arith.constant 1.000000e+00 : f32
    %73 = vector.broadcast %cst_35 : f32 to vector<8x16xf32>
    %74 = arith.subf %73, %66 : vector<8x16xf32>
    %75 = arith.mulf %74, %72 : vector<8x16xf32>
    %76 = arith.mulf %66, %24 : vector<8x16xf32>
    %77 = arith.addf %75, %76 : vector<8x16xf32>
    %78 = arith.index_cast %c0_i32 : i32 to index
    %c0_36 = arith.constant 0 : index
    %c0_37 = arith.constant 0 : index
    %79 = vector.load %arg10[%78, %c0_36, %c0_37] : memref<8x8x32xf32, #tpu.memory_space<vmem>>, vector<1x8x16xf32>
    %80 = vector.shape_cast %79 : vector<1x8x16xf32> to vector<8x16xf32>
    %81 = vector.shape_cast %56 : vector<8x16xf32> to vector<1x8x16xf32>
    tpu.vector_store %arg10[%78, %c0_36, %c0_37], %81 {strides = array<i32>} : memref<8x8x32xf32, #tpu.memory_space<vmem>>, vector<1x8x16xf32>,
    %82 = arith.index_cast %25 : i32 to index
    %c0_38 = arith.constant 0 : index
    %c16 = arith.constant 16 : index
    %83 = vector.load %arg10[%82, %c0_38, %c16] : memref<8x8x32xf32, #tpu.memory_space<vmem>>, vector<1x8x16xf32>
    %84 = vector.shape_cast %83 : vector<1x8x16xf32> to vector<8x16xf32>
    %85 = vector.shape_cast %77 : vector<8x16xf32> to vector<1x8x16xf32>
    tpu.vector_store %arg10[%82, %c0_38, %c16], %85 {strides = array<i32>} : memref<8x8x32xf32, #tpu.memory_space<vmem>>, vector<1x8x16xf32>,
    %c1_i32 = arith.constant 1 : i32
    %c7_i32_39 = arith.constant 7 : i32
    %86 = arith.subi %c7_i32_39, %c1_i32 : i32
    %c8_i32_40 = arith.constant 8 : i32
    %87 = arith.muli %c1_i32, %c8_i32_40 : i32
    %88 = tpu.assume_multiple %87, 8 : i32
    %c8_i32_41 = arith.constant 8 : i32
    %89 = arith.muli %86, %c8_i32_41 : i32
    %90 = tpu.assume_multiple %89, 8 : i32
    %91 = arith.index_cast %88 : i32 to index
    %c0_42 = arith.constant 0 : index
    %92 = vector.load %arg12[%91, %c0_42] : memref<64x48xf32, #tpu.memory_space<vmem>>, vector<8x48xf32>
    %93 = arith.index_cast %90 : i32 to index
    %c0_43 = arith.constant 0 : index
    %94 = vector.load %arg13[%93, %c0_43] : memref<64x48xf32, #tpu.memory_space<vmem>>, vector<8x48xf32>
    %cst_44 = arith.constant dense<0.000000e+00> : vector<8x48xf32>
    %95 = tpu.matmul %56, %13, %cst_44 {dimension_numbers = #tpu.dot_dimension_numbers<[1], [0], [0], [1], [0, 0, 1, 1], [], []>} : vector<8x16xf32>, vector<16x48xf32>, vector<8x48xf32> -> vector<8x48xf32>
    %cst_45 = arith.constant dense<0.000000e+00> : vector<8x48xf32>
    %96 = tpu.matmul %77, %14, %cst_45 {dimension_numbers = #tpu.dot_dimension_numbers<[1], [0], [0], [1], [0, 0, 1, 1], [], []>} : vector<8x16xf32>, vector<16x48xf32>, vector<8x48xf32> -> vector<8x48xf32>
    %97 = vector.extract_strided_slice %92 {offsets = [0, 0], sizes = [8, 32], strides = [1, 1]} : vector<8x48xf32> to vector<8x32xf32>
    %98 = vector.extract_strided_slice %95 {offsets = [0, 0], sizes = [8, 32], strides = [1, 1]} : vector<8x48xf32> to vector<8x32xf32>
    %99 = arith.addf %97, %98 : vector<8x32xf32>
    %100 = arith.negf %99 : vector<8x32xf32>
    %101 = math.exp %100 : vector<8x32xf32>
    %cst_46 = arith.constant 1.000000e+00 : f32
    %102 = vector.broadcast %cst_46 : f32 to vector<8x32xf32>
    %103 = arith.addf %102, %101 : vector<8x32xf32>
    %104 = arith.divf %102, %103 : vector<8x32xf32>
    %105 = vector.extract_strided_slice %104 {offsets = [0, 0], sizes = [8, 16], strides = [1, 1]} : vector<8x32xf32> to vector<8x16xf32>
    %106 = vector.extract_strided_slice %104 {offsets = [0, 16], sizes = [8, 16], strides = [1, 1]} : vector<8x32xf32> to vector<8x16xf32>
    %107 = vector.extract_strided_slice %92 {offsets = [0, 32], sizes = [8, 16], strides = [1, 1]} : vector<8x48xf32> to vector<8x16xf32>
    %108 = vector.extract_strided_slice %95 {offsets = [0, 32], sizes = [8, 16], strides = [1, 1]} : vector<8x48xf32> to vector<8x16xf32>
    %109 = arith.addf %108, %17 : vector<8x16xf32>
    %110 = arith.mulf %105, %109 : vector<8x16xf32>
    %111 = arith.addf %107, %110 : vector<8x16xf32>
    %112 = math.tanh %111 : vector<8x16xf32>
    %cst_47 = arith.constant 1.000000e+00 : f32
    %113 = vector.broadcast %cst_47 : f32 to vector<8x16xf32>
    %114 = arith.subf %113, %106 : vector<8x16xf32>
    %115 = arith.mulf %114, %112 : vector<8x16xf32>
    %116 = arith.mulf %106, %56 : vector<8x16xf32>
    %117 = arith.addf %115, %116 : vector<8x16xf32>
    %118 = vector.extract_strided_slice %94 {offsets = [0, 0], sizes = [8, 32], strides = [1, 1]} : vector<8x48xf32> to vector<8x32xf32>
    %119 = vector.extract_strided_slice %96 {offsets = [0, 0], sizes = [8, 32], strides = [1, 1]} : vector<8x48xf32> to vector<8x32xf32>
    %120 = arith.addf %118, %119 : vector<8x32xf32>
    %121 = arith.negf %120 : vector<8x32xf32>
    %122 = math.exp %121 : vector<8x32xf32>
    %cst_48 = arith.constant 1.000000e+00 : f32
    %123 = vector.broadcast %cst_48 : f32 to vector<8x32xf32>
    %124 = arith.addf %123, %122 : vector<8x32xf32>
    %125 = arith.divf %123, %124 : vector<8x32xf32>
    %126 = vector.extract_strided_slice %125 {offsets = [0, 0], sizes = [8, 16], strides = [1, 1]} : vector<8x32xf32> to vector<8x16xf32>
    %127 = vector.extract_strided_slice %125 {offsets = [0, 16], sizes = [8, 16], strides = [1, 1]} : vector<8x32xf32> to vector<8x16xf32>
    %128 = vector.extract_strided_slice %94 {offsets = [0, 32], sizes = [8, 16], strides = [1, 1]} : vector<8x48xf32> to vector<8x16xf32>
    %129 = vector.extract_strided_slice %96 {offsets = [0, 32], sizes = [8, 16], strides = [1, 1]} : vector<8x48xf32> to vector<8x16xf32>
    %130 = arith.addf %129, %20 : vector<8x16xf32>
    %131 = arith.mulf %126, %130 : vector<8x16xf32>
    %132 = arith.addf %128, %131 : vector<8x16xf32>
    %133 = math.tanh %132 : vector<8x16xf32>
    %cst_49 = arith.constant 1.000000e+00 : f32
    %134 = vector.broadcast %cst_49 : f32 to vector<8x16xf32>
    %135 = arith.subf %134, %127 : vector<8x16xf32>
    %136 = arith.mulf %135, %133 : vector<8x16xf32>
    %137 = arith.mulf %127, %77 : vector<8x16xf32>
    %138 = arith.addf %136, %137 : vector<8x16xf32>
    %139 = arith.index_cast %c1_i32 : i32 to index
    %c0_50 = arith.constant 0 : index
    %c0_51 = arith.constant 0 : index
    %140 = vector.load %arg10[%139, %c0_50, %c0_51] : memref<8x8x32xf32, #tpu.memory_space<vmem>>, vector<1x8x16xf32>
    %141 = vector.shape_cast %140 : vector<1x8x16xf32> to vector<8x16xf32>
    %142 = vector.shape_cast %117 : vector<8x16xf32> to vector<1x8x16xf32>
    tpu.vector_store %arg10[%139, %c0_50, %c0_51], %142 {strides = array<i32>} : memref<8x8x32xf32, #tpu.memory_space<vmem>>, vector<1x8x16xf32>,
    %143 = arith.index_cast %86 : i32 to index
    %c0_52 = arith.constant 0 : index
    %c16_53 = arith.constant 16 : index
    %144 = vector.load %arg10[%143, %c0_52, %c16_53] : memref<8x8x32xf32, #tpu.memory_space<vmem>>, vector<1x8x16xf32>
    %145 = vector.shape_cast %144 : vector<1x8x16xf32> to vector<8x16xf32>
    %146 = vector.shape_cast %138 : vector<8x16xf32> to vector<1x8x16xf32>
    tpu.vector_store %arg10[%143, %c0_52, %c16_53], %146 {strides = array<i32>} : memref<8x8x32xf32, #tpu.memory_space<vmem>>, vector<1x8x16xf32>,
    %c2_i32 = arith.constant 2 : i32
    %c7_i32_54 = arith.constant 7 : i32
    %147 = arith.subi %c7_i32_54, %c2_i32 : i32
    %c8_i32_55 = arith.constant 8 : i32
    %148 = arith.muli %c2_i32, %c8_i32_55 : i32
    %149 = tpu.assume_multiple %148, 8 : i32
    %c8_i32_56 = arith.constant 8 : i32
    %150 = arith.muli %147, %c8_i32_56 : i32
    %151 = tpu.assume_multiple %150, 8 : i32
    %152 = arith.index_cast %149 : i32 to index
    %c0_57 = arith.constant 0 : index
    %153 = vector.load %arg12[%152, %c0_57] : memref<64x48xf32, #tpu.memory_space<vmem>>, vector<8x48xf32>
    %154 = arith.index_cast %151 : i32 to index
    %c0_58 = arith.constant 0 : index
    %155 = vector.load %arg13[%154, %c0_58] : memref<64x48xf32, #tpu.memory_space<vmem>>, vector<8x48xf32>
    %cst_59 = arith.constant dense<0.000000e+00> : vector<8x48xf32>
    %156 = tpu.matmul %117, %13, %cst_59 {dimension_numbers = #tpu.dot_dimension_numbers<[1], [0], [0], [1], [0, 0, 1, 1], [], []>} : vector<8x16xf32>, vector<16x48xf32>, vector<8x48xf32> -> vector<8x48xf32>
    %cst_60 = arith.constant dense<0.000000e+00> : vector<8x48xf32>
    %157 = tpu.matmul %138, %14, %cst_60 {dimension_numbers = #tpu.dot_dimension_numbers<[1], [0], [0], [1], [0, 0, 1, 1], [], []>} : vector<8x16xf32>, vector<16x48xf32>, vector<8x48xf32> -> vector<8x48xf32>
    %158 = vector.extract_strided_slice %153 {offsets = [0, 0], sizes = [8, 32], strides = [1, 1]} : vector<8x48xf32> to vector<8x32xf32>
    %159 = vector.extract_strided_slice %156 {offsets = [0, 0], sizes = [8, 32], strides = [1, 1]} : vector<8x48xf32> to vector<8x32xf32>
    %160 = arith.addf %158, %159 : vector<8x32xf32>
    %161 = arith.negf %160 : vector<8x32xf32>
    %162 = math.exp %161 : vector<8x32xf32>
    %cst_61 = arith.constant 1.000000e+00 : f32
    %163 = vector.broadcast %cst_61 : f32 to vector<8x32xf32>
    %164 = arith.addf %163, %162 : vector<8x32xf32>
    %165 = arith.divf %163, %164 : vector<8x32xf32>
    %166 = vector.extract_strided_slice %165 {offsets = [0, 0], sizes = [8, 16], strides = [1, 1]} : vector<8x32xf32> to vector<8x16xf32>
    %167 = vector.extract_strided_slice %165 {offsets = [0, 16], sizes = [8, 16], strides = [1, 1]} : vector<8x32xf32> to vector<8x16xf32>
    %168 = vector.extract_strided_slice %153 {offsets = [0, 32], sizes = [8, 16], strides = [1, 1]} : vector<8x48xf32> to vector<8x16xf32>
    %169 = vector.extract_strided_slice %156 {offsets = [0, 32], sizes = [8, 16], strides = [1, 1]} : vector<8x48xf32> to vector<8x16xf32>
    %170 = arith.addf %169, %17 : vector<8x16xf32>
    %171 = arith.mulf %166, %170 : vector<8x16xf32>
    %172 = arith.addf %168, %171 : vector<8x16xf32>
    %173 = math.tanh %172 : vector<8x16xf32>
    %cst_62 = arith.constant 1.000000e+00 : f32
    %174 = vector.broadcast %cst_62 : f32 to vector<8x16xf32>
    %175 = arith.subf %174, %167 : vector<8x16xf32>
    %176 = arith.mulf %175, %173 : vector<8x16xf32>
    %177 = arith.mulf %167, %117 : vector<8x16xf32>
    %178 = arith.addf %176, %177 : vector<8x16xf32>
    %179 = vector.extract_strided_slice %155 {offsets = [0, 0], sizes = [8, 32], strides = [1, 1]} : vector<8x48xf32> to vector<8x32xf32>
    %180 = vector.extract_strided_slice %157 {offsets = [0, 0], sizes = [8, 32], strides = [1, 1]} : vector<8x48xf32> to vector<8x32xf32>
    %181 = arith.addf %179, %180 : vector<8x32xf32>
    %182 = arith.negf %181 : vector<8x32xf32>
    %183 = math.exp %182 : vector<8x32xf32>
    %cst_63 = arith.constant 1.000000e+00 : f32
    %184 = vector.broadcast %cst_63 : f32 to vector<8x32xf32>
    %185 = arith.addf %184, %183 : vector<8x32xf32>
    %186 = arith.divf %184, %185 : vector<8x32xf32>
    %187 = vector.extract_strided_slice %186 {offsets = [0, 0], sizes = [8, 16], strides = [1, 1]} : vector<8x32xf32> to vector<8x16xf32>
    %188 = vector.extract_strided_slice %186 {offsets = [0, 16], sizes = [8, 16], strides = [1, 1]} : vector<8x32xf32> to vector<8x16xf32>
    %189 = vector.extract_strided_slice %155 {offsets = [0, 32], sizes = [8, 16], strides = [1, 1]} : vector<8x48xf32> to vector<8x16xf32>
    %190 = vector.extract_strided_slice %157 {offsets = [0, 32], sizes = [8, 16], strides = [1, 1]} : vector<8x48xf32> to vector<8x16xf32>
    %191 = arith.addf %190, %20 : vector<8x16xf32>
    %192 = arith.mulf %187, %191 : vector<8x16xf32>
    %193 = arith.addf %189, %192 : vector<8x16xf32>
    %194 = math.tanh %193 : vector<8x16xf32>
    %cst_64 = arith.constant 1.000000e+00 : f32
    %195 = vector.broadcast %cst_64 : f32 to vector<8x16xf32>
    %196 = arith.subf %195, %188 : vector<8x16xf32>
    %197 = arith.mulf %196, %194 : vector<8x16xf32>
    %198 = arith.mulf %188, %138 : vector<8x16xf32>
    %199 = arith.addf %197, %198 : vector<8x16xf32>
    %200 = arith.index_cast %c2_i32 : i32 to index
    %c0_65 = arith.constant 0 : index
    %c0_66 = arith.constant 0 : index
    %201 = vector.load %arg10[%200, %c0_65, %c0_66] : memref<8x8x32xf32, #tpu.memory_space<vmem>>, vector<1x8x16xf32>
    %202 = vector.shape_cast %201 : vector<1x8x16xf32> to vector<8x16xf32>
    %203 = vector.shape_cast %178 : vector<8x16xf32> to vector<1x8x16xf32>
    tpu.vector_store %arg10[%200, %c0_65, %c0_66], %203 {strides = array<i32>} : memref<8x8x32xf32, #tpu.memory_space<vmem>>, vector<1x8x16xf32>,
    %204 = arith.index_cast %147 : i32 to index
    %c0_67 = arith.constant 0 : index
    %c16_68 = arith.constant 16 : index
    %205 = vector.load %arg10[%204, %c0_67, %c16_68] : memref<8x8x32xf32, #tpu.memory_space<vmem>>, vector<1x8x16xf32>
    %206 = vector.shape_cast %205 : vector<1x8x16xf32> to vector<8x16xf32>
    %207 = vector.shape_cast %199 : vector<8x16xf32> to vector<1x8x16xf32>
    tpu.vector_store %arg10[%204, %c0_67, %c16_68], %207 {strides = array<i32>} : memref<8x8x32xf32, #tpu.memory_space<vmem>>, vector<1x8x16xf32>,
    %c3_i32 = arith.constant 3 : i32
    %c7_i32_69 = arith.constant 7 : i32
    %208 = arith.subi %c7_i32_69, %c3_i32 : i32
    %c8_i32_70 = arith.constant 8 : i32
    %209 = arith.muli %c3_i32, %c8_i32_70 : i32
    %210 = tpu.assume_multiple %209, 8 : i32
    %c8_i32_71 = arith.constant 8 : i32
    %211 = arith.muli %208, %c8_i32_71 : i32
    %212 = tpu.assume_multiple %211, 8 : i32
    %213 = arith.index_cast %210 : i32 to index
    %c0_72 = arith.constant 0 : index
    %214 = vector.load %arg12[%213, %c0_72] : memref<64x48xf32, #tpu.memory_space<vmem>>, vector<8x48xf32>
    %215 = arith.index_cast %212 : i32 to index
    %c0_73 = arith.constant 0 : index
    %216 = vector.load %arg13[%215, %c0_73] : memref<64x48xf32, #tpu.memory_space<vmem>>, vector<8x48xf32>
    %cst_74 = arith.constant dense<0.000000e+00> : vector<8x48xf32>
    %217 = tpu.matmul %178, %13, %cst_74 {dimension_numbers = #tpu.dot_dimension_numbers<[1], [0], [0], [1], [0, 0, 1, 1], [], []>} : vector<8x16xf32>, vector<16x48xf32>, vector<8x48xf32> -> vector<8x48xf32>
    %cst_75 = arith.constant dense<0.000000e+00> : vector<8x48xf32>
    %218 = tpu.matmul %199, %14, %cst_75 {dimension_numbers = #tpu.dot_dimension_numbers<[1], [0], [0], [1], [0, 0, 1, 1], [], []>} : vector<8x16xf32>, vector<16x48xf32>, vector<8x48xf32> -> vector<8x48xf32>
    %219 = vector.extract_strided_slice %214 {offsets = [0, 0], sizes = [8, 32], strides = [1, 1]} : vector<8x48xf32> to vector<8x32xf32>
    %220 = vector.extract_strided_slice %217 {offsets = [0, 0], sizes = [8, 32], strides = [1, 1]} : vector<8x48xf32> to vector<8x32xf32>
    %221 = arith.addf %219, %220 : vector<8x32xf32>
    %222 = arith.negf %221 : vector<8x32xf32>
    %223 = math.exp %222 : vector<8x32xf32>
    %cst_76 = arith.constant 1.000000e+00 : f32
    %224 = vector.broadcast %cst_76 : f32 to vector<8x32xf32>
    %225 = arith.addf %224, %223 : vector<8x32xf32>
    %226 = arith.divf %224, %225 : vector<8x32xf32>
    %227 = vector.extract_strided_slice %226 {offsets = [0, 0], sizes = [8, 16], strides = [1, 1]} : vector<8x32xf32> to vector<8x16xf32>
    %228 = vector.extract_strided_slice %226 {offsets = [0, 16], sizes = [8, 16], strides = [1, 1]} : vector<8x32xf32> to vector<8x16xf32>
    %229 = vector.extract_strided_slice %214 {offsets = [0, 32], sizes = [8, 16], strides = [1, 1]} : vector<8x48xf32> to vector<8x16xf32>
    %230 = vector.extract_strided_slice %217 {offsets = [0, 32], sizes = [8, 16], strides = [1, 1]} : vector<8x48xf32> to vector<8x16xf32>
    %231 = arith.addf %230, %17 : vector<8x16xf32>
    %232 = arith.mulf %227, %231 : vector<8x16xf32>
    %233 = arith.addf %229, %232 : vector<8x16xf32>
    %234 = math.tanh %233 : vector<8x16xf32>
    %cst_77 = arith.constant 1.000000e+00 : f32
    %235 = vector.broadcast %cst_77 : f32 to vector<8x16xf32>
    %236 = arith.subf %235, %228 : vector<8x16xf32>
    %237 = arith.mulf %236, %234 : vector<8x16xf32>
    %238 = arith.mulf %228, %178 : vector<8x16xf32>
    %239 = arith.addf %237, %238 : vector<8x16xf32>
    %240 = vector.extract_strided_slice %216 {offsets = [0, 0], sizes = [8, 32], strides = [1, 1]} : vector<8x48xf32> to vector<8x32xf32>
    %241 = vector.extract_strided_slice %218 {offsets = [0, 0], sizes = [8, 32], strides = [1, 1]} : vector<8x48xf32> to vector<8x32xf32>
    %242 = arith.addf %240, %241 : vector<8x32xf32>
    %243 = arith.negf %242 : vector<8x32xf32>
    %244 = math.exp %243 : vector<8x32xf32>
    %cst_78 = arith.constant 1.000000e+00 : f32
    %245 = vector.broadcast %cst_78 : f32 to vector<8x32xf32>
    %246 = arith.addf %245, %244 : vector<8x32xf32>
    %247 = arith.divf %245, %246 : vector<8x32xf32>
    %248 = vector.extract_strided_slice %247 {offsets = [0, 0], sizes = [8, 16], strides = [1, 1]} : vector<8x32xf32> to vector<8x16xf32>
    %249 = vector.extract_strided_slice %247 {offsets = [0, 16], sizes = [8, 16], strides = [1, 1]} : vector<8x32xf32> to vector<8x16xf32>
    %250 = vector.extract_strided_slice %216 {offsets = [0, 32], sizes = [8, 16], strides = [1, 1]} : vector<8x48xf32> to vector<8x16xf32>
    %251 = vector.extract_strided_slice %218 {offsets = [0, 32], sizes = [8, 16], strides = [1, 1]} : vector<8x48xf32> to vector<8x16xf32>
    %252 = arith.addf %251, %20 : vector<8x16xf32>
    %253 = arith.mulf %248, %252 : vector<8x16xf32>
    %254 = arith.addf %250, %253 : vector<8x16xf32>
    %255 = math.tanh %254 : vector<8x16xf32>
    %cst_79 = arith.constant 1.000000e+00 : f32
    %256 = vector.broadcast %cst_79 : f32 to vector<8x16xf32>
    %257 = arith.subf %256, %249 : vector<8x16xf32>
    %258 = arith.mulf %257, %255 : vector<8x16xf32>
    %259 = arith.mulf %249, %199 : vector<8x16xf32>
    %260 = arith.addf %258, %259 : vector<8x16xf32>
    %261 = arith.index_cast %c3_i32 : i32 to index
    %c0_80 = arith.constant 0 : index
    %c0_81 = arith.constant 0 : index
    %262 = vector.load %arg10[%261, %c0_80, %c0_81] : memref<8x8x32xf32, #tpu.memory_space<vmem>>, vector<1x8x16xf32>
    %263 = vector.shape_cast %262 : vector<1x8x16xf32> to vector<8x16xf32>
    %264 = vector.shape_cast %239 : vector<8x16xf32> to vector<1x8x16xf32>
    tpu.vector_store %arg10[%261, %c0_80, %c0_81], %264 {strides = array<i32>} : memref<8x8x32xf32, #tpu.memory_space<vmem>>, vector<1x8x16xf32>,
    %265 = arith.index_cast %208 : i32 to index
    %c0_82 = arith.constant 0 : index
    %c16_83 = arith.constant 16 : index
    %266 = vector.load %arg10[%265, %c0_82, %c16_83] : memref<8x8x32xf32, #tpu.memory_space<vmem>>, vector<1x8x16xf32>
    %267 = vector.shape_cast %266 : vector<1x8x16xf32> to vector<8x16xf32>
    %268 = vector.shape_cast %260 : vector<8x16xf32> to vector<1x8x16xf32>
    tpu.vector_store %arg10[%265, %c0_82, %c16_83], %268 {strides = array<i32>} : memref<8x8x32xf32, #tpu.memory_space<vmem>>, vector<1x8x16xf32>,
    %c4_i32 = arith.constant 4 : i32
    %c7_i32_84 = arith.constant 7 : i32
    %269 = arith.subi %c7_i32_84, %c4_i32 : i32
    %c8_i32_85 = arith.constant 8 : i32
    %270 = arith.muli %c4_i32, %c8_i32_85 : i32
    %271 = tpu.assume_multiple %270, 8 : i32
    %c8_i32_86 = arith.constant 8 : i32
    %272 = arith.muli %269, %c8_i32_86 : i32
    %273 = tpu.assume_multiple %272, 8 : i32
    %274 = arith.index_cast %271 : i32 to index
    %c0_87 = arith.constant 0 : index
    %275 = vector.load %arg12[%274, %c0_87] : memref<64x48xf32, #tpu.memory_space<vmem>>, vector<8x48xf32>
    %276 = arith.index_cast %273 : i32 to index
    %c0_88 = arith.constant 0 : index
    %277 = vector.load %arg13[%276, %c0_88] : memref<64x48xf32, #tpu.memory_space<vmem>>, vector<8x48xf32>
    %cst_89 = arith.constant dense<0.000000e+00> : vector<8x48xf32>
    %278 = tpu.matmul %239, %13, %cst_89 {dimension_numbers = #tpu.dot_dimension_numbers<[1], [0], [0], [1], [0, 0, 1, 1], [], []>} : vector<8x16xf32>, vector<16x48xf32>, vector<8x48xf32> -> vector<8x48xf32>
    %cst_90 = arith.constant dense<0.000000e+00> : vector<8x48xf32>
    %279 = tpu.matmul %260, %14, %cst_90 {dimension_numbers = #tpu.dot_dimension_numbers<[1], [0], [0], [1], [0, 0, 1, 1], [], []>} : vector<8x16xf32>, vector<16x48xf32>, vector<8x48xf32> -> vector<8x48xf32>
    %280 = vector.extract_strided_slice %275 {offsets = [0, 0], sizes = [8, 32], strides = [1, 1]} : vector<8x48xf32> to vector<8x32xf32>
    %281 = vector.extract_strided_slice %278 {offsets = [0, 0], sizes = [8, 32], strides = [1, 1]} : vector<8x48xf32> to vector<8x32xf32>
    %282 = arith.addf %280, %281 : vector<8x32xf32>
    %283 = arith.negf %282 : vector<8x32xf32>
    %284 = math.exp %283 : vector<8x32xf32>
    %cst_91 = arith.constant 1.000000e+00 : f32
    %285 = vector.broadcast %cst_91 : f32 to vector<8x32xf32>
    %286 = arith.addf %285, %284 : vector<8x32xf32>
    %287 = arith.divf %285, %286 : vector<8x32xf32>
    %288 = vector.extract_strided_slice %287 {offsets = [0, 0], sizes = [8, 16], strides = [1, 1]} : vector<8x32xf32> to vector<8x16xf32>
    %289 = vector.extract_strided_slice %287 {offsets = [0, 16], sizes = [8, 16], strides = [1, 1]} : vector<8x32xf32> to vector<8x16xf32>
    %290 = vector.extract_strided_slice %275 {offsets = [0, 32], sizes = [8, 16], strides = [1, 1]} : vector<8x48xf32> to vector<8x16xf32>
    %291 = vector.extract_strided_slice %278 {offsets = [0, 32], sizes = [8, 16], strides = [1, 1]} : vector<8x48xf32> to vector<8x16xf32>
    %292 = arith.addf %291, %17 : vector<8x16xf32>
    %293 = arith.mulf %288, %292 : vector<8x16xf32>
    %294 = arith.addf %290, %293 : vector<8x16xf32>
    %295 = math.tanh %294 : vector<8x16xf32>
    %cst_92 = arith.constant 1.000000e+00 : f32
    %296 = vector.broadcast %cst_92 : f32 to vector<8x16xf32>
    %297 = arith.subf %296, %289 : vector<8x16xf32>
    %298 = arith.mulf %297, %295 : vector<8x16xf32>
    %299 = arith.mulf %289, %239 : vector<8x16xf32>
    %300 = arith.addf %298, %299 : vector<8x16xf32>
    %301 = vector.extract_strided_slice %277 {offsets = [0, 0], sizes = [8, 32], strides = [1, 1]} : vector<8x48xf32> to vector<8x32xf32>
    %302 = vector.extract_strided_slice %279 {offsets = [0, 0], sizes = [8, 32], strides = [1, 1]} : vector<8x48xf32> to vector<8x32xf32>
    %303 = arith.addf %301, %302 : vector<8x32xf32>
    %304 = arith.negf %303 : vector<8x32xf32>
    %305 = math.exp %304 : vector<8x32xf32>
    %cst_93 = arith.constant 1.000000e+00 : f32
    %306 = vector.broadcast %cst_93 : f32 to vector<8x32xf32>
    %307 = arith.addf %306, %305 : vector<8x32xf32>
    %308 = arith.divf %306, %307 : vector<8x32xf32>
    %309 = vector.extract_strided_slice %308 {offsets = [0, 0], sizes = [8, 16], strides = [1, 1]} : vector<8x32xf32> to vector<8x16xf32>
    %310 = vector.extract_strided_slice %308 {offsets = [0, 16], sizes = [8, 16], strides = [1, 1]} : vector<8x32xf32> to vector<8x16xf32>
    %311 = vector.extract_strided_slice %277 {offsets = [0, 32], sizes = [8, 16], strides = [1, 1]} : vector<8x48xf32> to vector<8x16xf32>
    %312 = vector.extract_strided_slice %279 {offsets = [0, 32], sizes = [8, 16], strides = [1, 1]} : vector<8x48xf32> to vector<8x16xf32>
    %313 = arith.addf %312, %20 : vector<8x16xf32>
    %314 = arith.mulf %309, %313 : vector<8x16xf32>
    %315 = arith.addf %311, %314 : vector<8x16xf32>
    %316 = math.tanh %315 : vector<8x16xf32>
    %cst_94 = arith.constant 1.000000e+00 : f32
    %317 = vector.broadcast %cst_94 : f32 to vector<8x16xf32>
    %318 = arith.subf %317, %310 : vector<8x16xf32>
    %319 = arith.mulf %318, %316 : vector<8x16xf32>
    %320 = arith.mulf %310, %260 : vector<8x16xf32>
    %321 = arith.addf %319, %320 : vector<8x16xf32>
    %322 = arith.index_cast %c4_i32 : i32 to index
    %c0_95 = arith.constant 0 : index
    %c0_96 = arith.constant 0 : index
    %323 = vector.load %arg10[%322, %c0_95, %c0_96] : memref<8x8x32xf32, #tpu.memory_space<vmem>>, vector<1x8x16xf32>
    %324 = vector.shape_cast %323 : vector<1x8x16xf32> to vector<8x16xf32>
    %325 = vector.shape_cast %300 : vector<8x16xf32> to vector<1x8x16xf32>
    tpu.vector_store %arg10[%322, %c0_95, %c0_96], %325 {strides = array<i32>} : memref<8x8x32xf32, #tpu.memory_space<vmem>>, vector<1x8x16xf32>,
    %326 = arith.index_cast %269 : i32 to index
    %c0_97 = arith.constant 0 : index
    %c16_98 = arith.constant 16 : index
    %327 = vector.load %arg10[%326, %c0_97, %c16_98] : memref<8x8x32xf32, #tpu.memory_space<vmem>>, vector<1x8x16xf32>
    %328 = vector.shape_cast %327 : vector<1x8x16xf32> to vector<8x16xf32>
    %329 = vector.shape_cast %321 : vector<8x16xf32> to vector<1x8x16xf32>
    tpu.vector_store %arg10[%326, %c0_97, %c16_98], %329 {strides = array<i32>} : memref<8x8x32xf32, #tpu.memory_space<vmem>>, vector<1x8x16xf32>,
    %c5_i32 = arith.constant 5 : i32
    %c7_i32_99 = arith.constant 7 : i32
    %330 = arith.subi %c7_i32_99, %c5_i32 : i32
    %c8_i32_100 = arith.constant 8 : i32
    %331 = arith.muli %c5_i32, %c8_i32_100 : i32
    %332 = tpu.assume_multiple %331, 8 : i32
    %c8_i32_101 = arith.constant 8 : i32
    %333 = arith.muli %330, %c8_i32_101 : i32
    %334 = tpu.assume_multiple %333, 8 : i32
    %335 = arith.index_cast %332 : i32 to index
    %c0_102 = arith.constant 0 : index
    %336 = vector.load %arg12[%335, %c0_102] : memref<64x48xf32, #tpu.memory_space<vmem>>, vector<8x48xf32>
    %337 = arith.index_cast %334 : i32 to index
    %c0_103 = arith.constant 0 : index
    %338 = vector.load %arg13[%337, %c0_103] : memref<64x48xf32, #tpu.memory_space<vmem>>, vector<8x48xf32>
    %cst_104 = arith.constant dense<0.000000e+00> : vector<8x48xf32>
    %339 = tpu.matmul %300, %13, %cst_104 {dimension_numbers = #tpu.dot_dimension_numbers<[1], [0], [0], [1], [0, 0, 1, 1], [], []>} : vector<8x16xf32>, vector<16x48xf32>, vector<8x48xf32> -> vector<8x48xf32>
    %cst_105 = arith.constant dense<0.000000e+00> : vector<8x48xf32>
    %340 = tpu.matmul %321, %14, %cst_105 {dimension_numbers = #tpu.dot_dimension_numbers<[1], [0], [0], [1], [0, 0, 1, 1], [], []>} : vector<8x16xf32>, vector<16x48xf32>, vector<8x48xf32> -> vector<8x48xf32>
    %341 = vector.extract_strided_slice %336 {offsets = [0, 0], sizes = [8, 32], strides = [1, 1]} : vector<8x48xf32> to vector<8x32xf32>
    %342 = vector.extract_strided_slice %339 {offsets = [0, 0], sizes = [8, 32], strides = [1, 1]} : vector<8x48xf32> to vector<8x32xf32>
    %343 = arith.addf %341, %342 : vector<8x32xf32>
    %344 = arith.negf %343 : vector<8x32xf32>
    %345 = math.exp %344 : vector<8x32xf32>
    %cst_106 = arith.constant 1.000000e+00 : f32
    %346 = vector.broadcast %cst_106 : f32 to vector<8x32xf32>
    %347 = arith.addf %346, %345 : vector<8x32xf32>
    %348 = arith.divf %346, %347 : vector<8x32xf32>
    %349 = vector.extract_strided_slice %348 {offsets = [0, 0], sizes = [8, 16], strides = [1, 1]} : vector<8x32xf32> to vector<8x16xf32>
    %350 = vector.extract_strided_slice %348 {offsets = [0, 16], sizes = [8, 16], strides = [1, 1]} : vector<8x32xf32> to vector<8x16xf32>
    %351 = vector.extract_strided_slice %336 {offsets = [0, 32], sizes = [8, 16], strides = [1, 1]} : vector<8x48xf32> to vector<8x16xf32>
    %352 = vector.extract_strided_slice %339 {offsets = [0, 32], sizes = [8, 16], strides = [1, 1]} : vector<8x48xf32> to vector<8x16xf32>
    %353 = arith.addf %352, %17 : vector<8x16xf32>
    %354 = arith.mulf %349, %353 : vector<8x16xf32>
    %355 = arith.addf %351, %354 : vector<8x16xf32>
    %356 = math.tanh %355 : vector<8x16xf32>
    %cst_107 = arith.constant 1.000000e+00 : f32
    %357 = vector.broadcast %cst_107 : f32 to vector<8x16xf32>
    %358 = arith.subf %357, %350 : vector<8x16xf32>
    %359 = arith.mulf %358, %356 : vector<8x16xf32>
    %360 = arith.mulf %350, %300 : vector<8x16xf32>
    %361 = arith.addf %359, %360 : vector<8x16xf32>
    %362 = vector.extract_strided_slice %338 {offsets = [0, 0], sizes = [8, 32], strides = [1, 1]} : vector<8x48xf32> to vector<8x32xf32>
    %363 = vector.extract_strided_slice %340 {offsets = [0, 0], sizes = [8, 32], strides = [1, 1]} : vector<8x48xf32> to vector<8x32xf32>
    %364 = arith.addf %362, %363 : vector<8x32xf32>
    %365 = arith.negf %364 : vector<8x32xf32>
    %366 = math.exp %365 : vector<8x32xf32>
    %cst_108 = arith.constant 1.000000e+00 : f32
    %367 = vector.broadcast %cst_108 : f32 to vector<8x32xf32>
    %368 = arith.addf %367, %366 : vector<8x32xf32>
    %369 = arith.divf %367, %368 : vector<8x32xf32>
    %370 = vector.extract_strided_slice %369 {offsets = [0, 0], sizes = [8, 16], strides = [1, 1]} : vector<8x32xf32> to vector<8x16xf32>
    %371 = vector.extract_strided_slice %369 {offsets = [0, 16], sizes = [8, 16], strides = [1, 1]} : vector<8x32xf32> to vector<8x16xf32>
    %372 = vector.extract_strided_slice %338 {offsets = [0, 32], sizes = [8, 16], strides = [1, 1]} : vector<8x48xf32> to vector<8x16xf32>
    %373 = vector.extract_strided_slice %340 {offsets = [0, 32], sizes = [8, 16], strides = [1, 1]} : vector<8x48xf32> to vector<8x16xf32>
    %374 = arith.addf %373, %20 : vector<8x16xf32>
    %375 = arith.mulf %370, %374 : vector<8x16xf32>
    %376 = arith.addf %372, %375 : vector<8x16xf32>
    %377 = math.tanh %376 : vector<8x16xf32>
    %cst_109 = arith.constant 1.000000e+00 : f32
    %378 = vector.broadcast %cst_109 : f32 to vector<8x16xf32>
    %379 = arith.subf %378, %371 : vector<8x16xf32>
    %380 = arith.mulf %379, %377 : vector<8x16xf32>
    %381 = arith.mulf %371, %321 : vector<8x16xf32>
    %382 = arith.addf %380, %381 : vector<8x16xf32>
    %383 = arith.index_cast %c5_i32 : i32 to index
    %c0_110 = arith.constant 0 : index
    %c0_111 = arith.constant 0 : index
    %384 = vector.load %arg10[%383, %c0_110, %c0_111] : memref<8x8x32xf32, #tpu.memory_space<vmem>>, vector<1x8x16xf32>
    %385 = vector.shape_cast %384 : vector<1x8x16xf32> to vector<8x16xf32>
    %386 = vector.shape_cast %361 : vector<8x16xf32> to vector<1x8x16xf32>
    tpu.vector_store %arg10[%383, %c0_110, %c0_111], %386 {strides = array<i32>} : memref<8x8x32xf32, #tpu.memory_space<vmem>>, vector<1x8x16xf32>,
    %387 = arith.index_cast %330 : i32 to index
    %c0_112 = arith.constant 0 : index
    %c16_113 = arith.constant 16 : index
    %388 = vector.load %arg10[%387, %c0_112, %c16_113] : memref<8x8x32xf32, #tpu.memory_space<vmem>>, vector<1x8x16xf32>
    %389 = vector.shape_cast %388 : vector<1x8x16xf32> to vector<8x16xf32>
    %390 = vector.shape_cast %382 : vector<8x16xf32> to vector<1x8x16xf32>
    tpu.vector_store %arg10[%387, %c0_112, %c16_113], %390 {strides = array<i32>} : memref<8x8x32xf32, #tpu.memory_space<vmem>>, vector<1x8x16xf32>,
    %c6_i32 = arith.constant 6 : i32
    %c7_i32_114 = arith.constant 7 : i32
    %391 = arith.subi %c7_i32_114, %c6_i32 : i32
    %c8_i32_115 = arith.constant 8 : i32
    %392 = arith.muli %c6_i32, %c8_i32_115 : i32
    %393 = tpu.assume_multiple %392, 8 : i32
    %c8_i32_116 = arith.constant 8 : i32
    %394 = arith.muli %391, %c8_i32_116 : i32
    %395 = tpu.assume_multiple %394, 8 : i32
    %396 = arith.index_cast %393 : i32 to index
    %c0_117 = arith.constant 0 : index
    %397 = vector.load %arg12[%396, %c0_117] : memref<64x48xf32, #tpu.memory_space<vmem>>, vector<8x48xf32>
    %398 = arith.index_cast %395 : i32 to index
    %c0_118 = arith.constant 0 : index
    %399 = vector.load %arg13[%398, %c0_118] : memref<64x48xf32, #tpu.memory_space<vmem>>, vector<8x48xf32>
    %cst_119 = arith.constant dense<0.000000e+00> : vector<8x48xf32>
    %400 = tpu.matmul %361, %13, %cst_119 {dimension_numbers = #tpu.dot_dimension_numbers<[1], [0], [0], [1], [0, 0, 1, 1], [], []>} : vector<8x16xf32>, vector<16x48xf32>, vector<8x48xf32> -> vector<8x48xf32>
    %cst_120 = arith.constant dense<0.000000e+00> : vector<8x48xf32>
    %401 = tpu.matmul %382, %14, %cst_120 {dimension_numbers = #tpu.dot_dimension_numbers<[1], [0], [0], [1], [0, 0, 1, 1], [], []>} : vector<8x16xf32>, vector<16x48xf32>, vector<8x48xf32> -> vector<8x48xf32>
    %402 = vector.extract_strided_slice %397 {offsets = [0, 0], sizes = [8, 32], strides = [1, 1]} : vector<8x48xf32> to vector<8x32xf32>
    %403 = vector.extract_strided_slice %400 {offsets = [0, 0], sizes = [8, 32], strides = [1, 1]} : vector<8x48xf32> to vector<8x32xf32>
    %404 = arith.addf %402, %403 : vector<8x32xf32>
    %405 = arith.negf %404 : vector<8x32xf32>
    %406 = math.exp %405 : vector<8x32xf32>
    %cst_121 = arith.constant 1.000000e+00 : f32
    %407 = vector.broadcast %cst_121 : f32 to vector<8x32xf32>
    %408 = arith.addf %407, %406 : vector<8x32xf32>
    %409 = arith.divf %407, %408 : vector<8x32xf32>
    %410 = vector.extract_strided_slice %409 {offsets = [0, 0], sizes = [8, 16], strides = [1, 1]} : vector<8x32xf32> to vector<8x16xf32>
    %411 = vector.extract_strided_slice %409 {offsets = [0, 16], sizes = [8, 16], strides = [1, 1]} : vector<8x32xf32> to vector<8x16xf32>
    %412 = vector.extract_strided_slice %397 {offsets = [0, 32], sizes = [8, 16], strides = [1, 1]} : vector<8x48xf32> to vector<8x16xf32>
    %413 = vector.extract_strided_slice %400 {offsets = [0, 32], sizes = [8, 16], strides = [1, 1]} : vector<8x48xf32> to vector<8x16xf32>
    %414 = arith.addf %413, %17 : vector<8x16xf32>
    %415 = arith.mulf %410, %414 : vector<8x16xf32>
    %416 = arith.addf %412, %415 : vector<8x16xf32>
    %417 = math.tanh %416 : vector<8x16xf32>
    %cst_122 = arith.constant 1.000000e+00 : f32
    %418 = vector.broadcast %cst_122 : f32 to vector<8x16xf32>
    %419 = arith.subf %418, %411 : vector<8x16xf32>
    %420 = arith.mulf %419, %417 : vector<8x16xf32>
    %421 = arith.mulf %411, %361 : vector<8x16xf32>
    %422 = arith.addf %420, %421 : vector<8x16xf32>
    %423 = vector.extract_strided_slice %399 {offsets = [0, 0], sizes = [8, 32], strides = [1, 1]} : vector<8x48xf32> to vector<8x32xf32>
    %424 = vector.extract_strided_slice %401 {offsets = [0, 0], sizes = [8, 32], strides = [1, 1]} : vector<8x48xf32> to vector<8x32xf32>
    %425 = arith.addf %423, %424 : vector<8x32xf32>
    %426 = arith.negf %425 : vector<8x32xf32>
    %427 = math.exp %426 : vector<8x32xf32>
    %cst_123 = arith.constant 1.000000e+00 : f32
    %428 = vector.broadcast %cst_123 : f32 to vector<8x32xf32>
    %429 = arith.addf %428, %427 : vector<8x32xf32>
    %430 = arith.divf %428, %429 : vector<8x32xf32>
    %431 = vector.extract_strided_slice %430 {offsets = [0, 0], sizes = [8, 16], strides = [1, 1]} : vector<8x32xf32> to vector<8x16xf32>
    %432 = vector.extract_strided_slice %430 {offsets = [0, 16], sizes = [8, 16], strides = [1, 1]} : vector<8x32xf32> to vector<8x16xf32>
    %433 = vector.extract_strided_slice %399 {offsets = [0, 32], sizes = [8, 16], strides = [1, 1]} : vector<8x48xf32> to vector<8x16xf32>
    %434 = vector.extract_strided_slice %401 {offsets = [0, 32], sizes = [8, 16], strides = [1, 1]} : vector<8x48xf32> to vector<8x16xf32>
    %435 = arith.addf %434, %20 : vector<8x16xf32>
    %436 = arith.mulf %431, %435 : vector<8x16xf32>
    %437 = arith.addf %433, %436 : vector<8x16xf32>
    %438 = math.tanh %437 : vector<8x16xf32>
    %cst_124 = arith.constant 1.000000e+00 : f32
    %439 = vector.broadcast %cst_124 : f32 to vector<8x16xf32>
    %440 = arith.subf %439, %432 : vector<8x16xf32>
    %441 = arith.mulf %440, %438 : vector<8x16xf32>
    %442 = arith.mulf %432, %382 : vector<8x16xf32>
    %443 = arith.addf %441, %442 : vector<8x16xf32>
    %444 = arith.index_cast %c6_i32 : i32 to index
    %c0_125 = arith.constant 0 : index
    %c0_126 = arith.constant 0 : index
    %445 = vector.load %arg10[%444, %c0_125, %c0_126] : memref<8x8x32xf32, #tpu.memory_space<vmem>>, vector<1x8x16xf32>
    %446 = vector.shape_cast %445 : vector<1x8x16xf32> to vector<8x16xf32>
    %447 = vector.shape_cast %422 : vector<8x16xf32> to vector<1x8x16xf32>
    tpu.vector_store %arg10[%444, %c0_125, %c0_126], %447 {strides = array<i32>} : memref<8x8x32xf32, #tpu.memory_space<vmem>>, vector<1x8x16xf32>,
    %448 = arith.index_cast %391 : i32 to index
    %c0_127 = arith.constant 0 : index
    %c16_128 = arith.constant 16 : index
    %449 = vector.load %arg10[%448, %c0_127, %c16_128] : memref<8x8x32xf32, #tpu.memory_space<vmem>>, vector<1x8x16xf32>
    %450 = vector.shape_cast %449 : vector<1x8x16xf32> to vector<8x16xf32>
    %451 = vector.shape_cast %443 : vector<8x16xf32> to vector<1x8x16xf32>
    tpu.vector_store %arg10[%448, %c0_127, %c16_128], %451 {strides = array<i32>} : memref<8x8x32xf32, #tpu.memory_space<vmem>>, vector<1x8x16xf32>,
    %c7_i32_129 = arith.constant 7 : i32
    %c7_i32_130 = arith.constant 7 : i32
    %452 = arith.subi %c7_i32_130, %c7_i32_129 : i32
    %c8_i32_131 = arith.constant 8 : i32
    %453 = arith.muli %c7_i32_129, %c8_i32_131 : i32
    %454 = tpu.assume_multiple %453, 8 : i32
    %c8_i32_132 = arith.constant 8 : i32
    %455 = arith.muli %452, %c8_i32_132 : i32
    %456 = tpu.assume_multiple %455, 8 : i32
    %457 = arith.index_cast %454 : i32 to index
    %c0_133 = arith.constant 0 : index
    %458 = vector.load %arg12[%457, %c0_133] : memref<64x48xf32, #tpu.memory_space<vmem>>, vector<8x48xf32>
    %459 = arith.index_cast %456 : i32 to index
    %c0_134 = arith.constant 0 : index
    %460 = vector.load %arg13[%459, %c0_134] : memref<64x48xf32, #tpu.memory_space<vmem>>, vector<8x48xf32>
    %cst_135 = arith.constant dense<0.000000e+00> : vector<8x48xf32>
    %461 = tpu.matmul %422, %13, %cst_135 {dimension_numbers = #tpu.dot_dimension_numbers<[1], [0], [0], [1], [0, 0, 1, 1], [], []>} : vector<8x16xf32>, vector<16x48xf32>, vector<8x48xf32> -> vector<8x48xf32>
    %cst_136 = arith.constant dense<0.000000e+00> : vector<8x48xf32>
    %462 = tpu.matmul %443, %14, %cst_136 {dimension_numbers = #tpu.dot_dimension_numbers<[1], [0], [0], [1], [0, 0, 1, 1], [], []>} : vector<8x16xf32>, vector<16x48xf32>, vector<8x48xf32> -> vector<8x48xf32>
    %463 = vector.extract_strided_slice %458 {offsets = [0, 0], sizes = [8, 32], strides = [1, 1]} : vector<8x48xf32> to vector<8x32xf32>
    %464 = vector.extract_strided_slice %461 {offsets = [0, 0], sizes = [8, 32], strides = [1, 1]} : vector<8x48xf32> to vector<8x32xf32>
    %465 = arith.addf %463, %464 : vector<8x32xf32>
    %466 = arith.negf %465 : vector<8x32xf32>
    %467 = math.exp %466 : vector<8x32xf32>
    %cst_137 = arith.constant 1.000000e+00 : f32
    %468 = vector.broadcast %cst_137 : f32 to vector<8x32xf32>
    %469 = arith.addf %468, %467 : vector<8x32xf32>
    %470 = arith.divf %468, %469 : vector<8x32xf32>
    %471 = vector.extract_strided_slice %470 {offsets = [0, 0], sizes = [8, 16], strides = [1, 1]} : vector<8x32xf32> to vector<8x16xf32>
    %472 = vector.extract_strided_slice %470 {offsets = [0, 16], sizes = [8, 16], strides = [1, 1]} : vector<8x32xf32> to vector<8x16xf32>
    %473 = vector.extract_strided_slice %458 {offsets = [0, 32], sizes = [8, 16], strides = [1, 1]} : vector<8x48xf32> to vector<8x16xf32>
    %474 = vector.extract_strided_slice %461 {offsets = [0, 32], sizes = [8, 16], strides = [1, 1]} : vector<8x48xf32> to vector<8x16xf32>
    %475 = arith.addf %474, %17 : vector<8x16xf32>
    %476 = arith.mulf %471, %475 : vector<8x16xf32>
    %477 = arith.addf %473, %476 : vector<8x16xf32>
    %478 = math.tanh %477 : vector<8x16xf32>
    %cst_138 = arith.constant 1.000000e+00 : f32
    %479 = vector.broadcast %cst_138 : f32 to vector<8x16xf32>
    %480 = arith.subf %479, %472 : vector<8x16xf32>
    %481 = arith.mulf %480, %478 : vector<8x16xf32>
    %482 = arith.mulf %472, %422 : vector<8x16xf32>
    %483 = arith.addf %481, %482 : vector<8x16xf32>
    %484 = vector.extract_strided_slice %460 {offsets = [0, 0], sizes = [8, 32], strides = [1, 1]} : vector<8x48xf32> to vector<8x32xf32>
    %485 = vector.extract_strided_slice %462 {offsets = [0, 0], sizes = [8, 32], strides = [1, 1]} : vector<8x48xf32> to vector<8x32xf32>
    %486 = arith.addf %484, %485 : vector<8x32xf32>
    %487 = arith.negf %486 : vector<8x32xf32>
    %488 = math.exp %487 : vector<8x32xf32>
    %cst_139 = arith.constant 1.000000e+00 : f32
    %489 = vector.broadcast %cst_139 : f32 to vector<8x32xf32>
    %490 = arith.addf %489, %488 : vector<8x32xf32>
    %491 = arith.divf %489, %490 : vector<8x32xf32>
    %492 = vector.extract_strided_slice %491 {offsets = [0, 0], sizes = [8, 16], strides = [1, 1]} : vector<8x32xf32> to vector<8x16xf32>
    %493 = vector.extract_strided_slice %491 {offsets = [0, 16], sizes = [8, 16], strides = [1, 1]} : vector<8x32xf32> to vector<8x16xf32>
    %494 = vector.extract_strided_slice %460 {offsets = [0, 32], sizes = [8, 16], strides = [1, 1]} : vector<8x48xf32> to vector<8x16xf32>
    %495 = vector.extract_strided_slice %462 {offsets = [0, 32], sizes = [8, 16], strides = [1, 1]} : vector<8x48xf32> to vector<8x16xf32>
    %496 = arith.addf %495, %20 : vector<8x16xf32>
    %497 = arith.mulf %492, %496 : vector<8x16xf32>
    %498 = arith.addf %494, %497 : vector<8x16xf32>
    %499 = math.tanh %498 : vector<8x16xf32>
    %cst_140 = arith.constant 1.000000e+00 : f32
    %500 = vector.broadcast %cst_140 : f32 to vector<8x16xf32>
    %501 = arith.subf %500, %493 : vector<8x16xf32>
    %502 = arith.mulf %501, %499 : vector<8x16xf32>
    %503 = arith.mulf %493, %443 : vector<8x16xf32>
    %504 = arith.addf %502, %503 : vector<8x16xf32>
    %505 = arith.index_cast %c7_i32_129 : i32 to index
    %c0_141 = arith.constant 0 : index
    %c0_142 = arith.constant 0 : index
    %506 = vector.load %arg10[%505, %c0_141, %c0_142] : memref<8x8x32xf32, #tpu.memory_space<vmem>>, vector<1x8x16xf32>
    %507 = vector.shape_cast %506 : vector<1x8x16xf32> to vector<8x16xf32>
    %508 = vector.shape_cast %483 : vector<8x16xf32> to vector<1x8x16xf32>
    tpu.vector_store %arg10[%505, %c0_141, %c0_142], %508 {strides = array<i32>} : memref<8x8x32xf32, #tpu.memory_space<vmem>>, vector<1x8x16xf32>,
    %509 = arith.index_cast %452 : i32 to index
    %c0_143 = arith.constant 0 : index
    %c16_144 = arith.constant 16 : index
    %510 = vector.load %arg10[%509, %c0_143, %c16_144] : memref<8x8x32xf32, #tpu.memory_space<vmem>>, vector<1x8x16xf32>
    %511 = vector.shape_cast %510 : vector<1x8x16xf32> to vector<8x16xf32>
    %512 = vector.shape_cast %504 : vector<8x16xf32> to vector<1x8x16xf32>
    tpu.vector_store %arg10[%509, %c0_143, %c16_144], %512 {strides = array<i32>} : memref<8x8x32xf32, #tpu.memory_space<vmem>>, vector<1x8x16xf32>,
    %c8_i32_145 = arith.constant 8 : i32
    %c0_146 = arith.constant 0 : index
    %c0_147 = arith.constant 0 : index
    %c0_148 = arith.constant 0 : index
    %513 = vector.load %arg11[%c0_146, %c0_147, %c0_148] : memref<2x8x16xf32, #tpu.memory_space<vmem>>, vector<1x8x16xf32>
    %514 = vector.shape_cast %513 : vector<1x8x16xf32> to vector<8x16xf32>
    %515 = vector.shape_cast %483 : vector<8x16xf32> to vector<1x8x16xf32>
    tpu.vector_store %arg11[%c0_146, %c0_147, %c0_148], %515 {strides = array<i32>} : memref<2x8x16xf32, #tpu.memory_space<vmem>>, vector<1x8x16xf32>,
    %c1_149 = arith.constant 1 : index
    %c0_150 = arith.constant 0 : index
    %c0_151 = arith.constant 0 : index
    %516 = vector.load %arg11[%c1_149, %c0_150, %c0_151] : memref<2x8x16xf32, #tpu.memory_space<vmem>>, vector<1x8x16xf32>
    %517 = vector.shape_cast %516 : vector<1x8x16xf32> to vector<8x16xf32>
    %518 = vector.shape_cast %504 : vector<8x16xf32> to vector<1x8x16xf32>
    tpu.vector_store %arg11[%c1_149, %c0_150, %c0_151], %518 {strides = array<i32>} : memref<2x8x16xf32, #tpu.memory_space<vmem>>, vector<1x8x16xf32>,
    return
  }
}

</mosaic_0001>

<llo_original>
// kernel: encoder_forward.1
$region0: #{encoder_forward.1}
  #allocation0 [shape = 'u32[]', space=smem, size = 0x4, offset = 0x4, fixed_abs, tag = 'smem constant byte address 0x4 - core index']
  #allocation1 [shape = 'u32[144,128]{1,0:T(1,128)}', space=vmem, size = 0x12000, scoped, tag = 'internal scratch']
  #allocation2 [shape = 'f32[64,48]{1,0:T(8,128)}', space=vmem, size = 0x8000, scoped, tag = 'scratch operand']
  #allocation3 [shape = 'f32[64,48]{1,0:T(8,128)}', space=vmem, size = 0x8000, scoped, tag = 'scratch operand']
  %s0 = inlined_call_operand.vmem [shape: f32[64,16], index: 0, kind: input, shape index: {}]
  %s1 = inlined_call_operand.vmem [shape: f32[16,48], index: 1, kind: input, shape index: {}]
  %s2 = inlined_call_operand.vmem [shape: f32[16,48], index: 2, kind: input, shape index: {}]
  %s3 = inlined_call_operand.vmem [shape: f32[1,48], index: 3, kind: input, shape index: {}]
  %s4 = inlined_call_operand.vmem [shape: f32[1,16], index: 4, kind: input, shape index: {}]
  %s5 = inlined_call_operand.vmem [shape: f32[16,48], index: 5, kind: input, shape index: {}]
  %s6 = inlined_call_operand.vmem [shape: f32[16,48], index: 6, kind: input, shape index: {}]
  %s7 = inlined_call_operand.vmem [shape: f32[1,48], index: 7, kind: input, shape index: {}]
  %s8 = inlined_call_operand.vmem [shape: f32[1,16], index: 8, kind: input, shape index: {}]
  %s9 = inlined_call_operand.vmem [shape: f32[2,8,16], index: 9, kind: input, shape index: {}]
  %s10 = inlined_call_operand.vmem [shape: f32[8,8,32], index: 10, kind: output, shape index: {0}]
  %s11 = inlined_call_operand.vmem [shape: f32[2,8,16], index: 11, kind: output, shape index: {1}]
  %12 = xla_tuple %s10, %s11
  %s13 = sld [smem:[#allocation0]]
  $region58: #{encoder_forward.1} parent=0
    _
  %s15 = ssub.s32 1, %s13
  %s16 = scalar_select 0, %s15, %s13
  // Predicated region
  $region2: #{encoder_forward.1} parent=0 // pred_check
    _
  $region3: #{encoder_forward.1} parent=0 // pred_check_branch
    %18 = sbr.rel (0) target = $region5
  $region4: #{encoder_forward.1} parent=0 // pred_region
    _
  $region5: #{encoder_forward.1} parent=0 // pred_fallthru
    _
  // Predicated region
  $region6: #{encoder_forward.1} parent=0 // pred_check
    _
  $region7: #{encoder_forward.1} parent=0 // pred_check_branch
    %20 = sbr.rel (0) target = $region9
  $region8: #{encoder_forward.1} parent=0 // pred_region
    _
  $region9: #{encoder_forward.1} parent=0 // pred_fallthru
    _
  // Predicated region
  $region10: #{encoder_forward.1} parent=0 // pred_check
    _
  $region11: #{encoder_forward.1} parent=0 // pred_check_branch
    %22 = sbr.rel (0) target = $region13
  $region12: #{encoder_forward.1} parent=0 // pred_region
    _
  $region13: #{encoder_forward.1} parent=0 // pred_fallthru
    _
  // Predicated region
  $region14: #{encoder_forward.1} parent=0 // pred_check
    _
  $region15: #{encoder_forward.1} parent=0 // pred_check_branch
    %24 = sbr.rel (0) target = $region17
  $region16: #{encoder_forward.1} parent=0 // pred_region
    _
  $region17: #{encoder_forward.1} parent=0 // pred_fallthru
    _
  // Predicated region
  $region18: #{encoder_forward.1} parent=0 // pred_check
    _
  $region19: #{encoder_forward.1} parent=0 // pred_check_branch
    %26 = sbr.rel (0) target = $region21
  $region20: #{encoder_forward.1} parent=0 // pred_region
    _
  $region21: #{encoder_forward.1} parent=0 // pred_fallthru
    _
  // Predicated region
  $region22: #{encoder_forward.1} parent=0 // pred_check
    _
  $region23: #{encoder_forward.1} parent=0 // pred_check_branch
    %28 = sbr.rel (0) target = $region25
  $region24: #{encoder_forward.1} parent=0 // pred_region
    _
  $region25: #{encoder_forward.1} parent=0 // pred_fallthru
    _
  // Predicated region
  $region26: #{encoder_forward.1} parent=0 // pred_check
    _
  $region27: #{encoder_forward.1} parent=0 // pred_check_branch
    %30 = sbr.rel (0) target = $region29
  $region28: #{encoder_forward.1} parent=0 // pred_region
    _
  $region29: #{encoder_forward.1} parent=0 // pred_fallthru
    _
  // Predicated region
  $region30: #{encoder_forward.1} parent=0 // pred_check
    _
  $region31: #{encoder_forward.1} parent=0 // pred_check_branch
    %32 = sbr.rel (0) target = $region33
  $region32: #{encoder_forward.1} parent=0 // pred_region
    _
  $region33: #{encoder_forward.1} parent=0 // pred_fallthru
    _
  // Predicated region
  $region34: #{encoder_forward.1} parent=0 // pred_check
    _
  $region35: #{encoder_forward.1} parent=0 // pred_check_branch
    %34 = sbr.rel (0) target = $region37
  $region36: #{encoder_forward.1} parent=0 // pred_region
    _
  $region37: #{encoder_forward.1} parent=0 // pred_fallthru
    _
  // Predicated region
  $region38: #{encoder_forward.1} parent=0 // pred_check
    _
  $region39: #{encoder_forward.1} parent=0 // pred_check_branch
    %36 = sbr.rel (0) target = $region41
  $region40: #{encoder_forward.1} parent=0 // pred_region
    _
  $region41: #{encoder_forward.1} parent=0 // pred_fallthru
    _
  %v37 = vld [vmem:[%s0] sm:$0xff]
  %v38 = vld [vmem:[%s0 + $0x8] sm:$0xff]
  %v39 = vld [vmem:[%s0 + $0x10] sm:$0xff]
  %v40 = vld [vmem:[%s0 + $0x18] sm:$0xff]
  %v41 = vld [vmem:[%s0 + $0x20] sm:$0xff]
  %v42 = vld [vmem:[%s0 + $0x28] sm:$0xff]
  %v43 = vld [vmem:[%s0 + $0x30] sm:$0xff]
  %v44 = vld [vmem:[%s0 + $0x38] sm:$0xff]
  %v45 = vld [vmem:[%s1] sm:$0xff]
  %v46 = vld [vmem:[%s1 + $0x8] sm:$0xff]
  %v47 = vld [vmem:[%s3] sm:$0x1]
  %v49 = vlaneseq
  %v50 = vshrl.u32 %v49, 7
  %v51 = vsub.s32 0, %v50
  %v52 = vrot.slane %v47, %v51
  %vm54 = vcmask 130048
  %v56 = vsel %vm54, %v37, 0
  %v59 = vsel %vm54, %v38, 0
  %v62 = vsel %vm54, %v39, 0
  %v65 = vsel %vm54, %v40, 0
  %v68 = vsel %vm54, %v41, 0
  %v71 = vsel %vm54, %v42, 0
  %v74 = vsel %vm54, %v43, 0
  %v77 = vsel %vm54, %v44, 0
  %79 = vmatprep.subr.mxu0 0.0
  %80 = vmatpush1.msra.mxu0 %v45
  %81 = vmatprep.subr.mxu0 0.0
  %82 = vmatpush1.msra.mxu0 %v46
  %83 = vmatprep.subr.mxu0 0.0
  %84 = vmatpush1.msra.mxu0 0.0
  %85 = vmatprep.subr.mxu0 0.0
  %86 = vmatpush1.msra.mxu0 0.0
  %87 = vmatprep.subr.mxu0 0.0
  %88 = vmatpush1.msra.mxu0 0.0
  %89 = vmatprep.subr.mxu0 0.0
  %90 = vmatpush1.msra.mxu0 0.0
  %91 = vmatprep.subr.mxu0 0.0
  %92 = vmatpush1.msra.mxu0 0.0
  %93 = vmatprep.subr.mxu0 0.0
  %94 = vmatpush1.msra.mxu0 0.0
  %95 = vmatprep.subr.mxu0 0.0
  %96 = vmatpush1.msra.mxu0 0.0
  %97 = vmatprep.subr.mxu0 0.0
  %98 = vmatpush1.msra.mxu0 0.0
  %99 = vmatprep.subr.mxu0 0.0
  %100 = vmatpush1.msra.mxu0 0.0
  %101 = vmatprep.subr.mxu0 0.0
  %102 = vmatpush1.msra.mxu0 0.0
  %103 = vmatprep.subr.mxu0 0.0
  %104 = vmatpush1.msra.mxu0 0.0
  %105 = vmatprep.subr.mxu0 0.0
  %106 = vmatpush1.msra.mxu0 0.0
  %107 = vmatprep.subr.mxu0 0.0
  %108 = vmatpush1.msra.mxu0 0.0
  %109 = vmatprep.subr.mxu0 0.0
  %110 = vmatpush1.msra.mxu0 0.0
  %111 = vmatprep.subr.mxu0 0.0
  %112 = vmatpush1.msra.mxu0 0.0
  %113 = vmatprep.subr.mxu0 0.0
  %114 = vmatpush1.msra.mxu0 0.0
  %115 = vmatprep.subr.mxu0 0.0
  %116 = vmatpush1.msra.mxu0 0.0
  %117 = vmatprep.subr.mxu0 0.0
  %118 = vmatpush1.msra.mxu0 0.0
  %119 = vmatprep.subr.mxu0 0.0
  %120 = vmatpush1.msra.mxu0 0.0
  %121 = vmatprep.subr.mxu0 0.0
  %122 = vmatpush1.msra.mxu0 0.0
  %123 = vmatprep.subr.mxu0 0.0
  %124 = vmatpush1.msra.mxu0 0.0
  %125 = vmatprep.subr.mxu0 0.0
  %126 = vmatpush1.msra.mxu0 0.0
  %127 = vmatprep.subr.mxu0 0.0
  %128 = vmatpush1.msra.mxu0 0.0
  %129 = vmatprep.subr.mxu0 0.0
  %130 = vmatpush1.msra.mxu0 0.0
  %131 = vmatprep.subr.mxu0 0.0
  %132 = vmatpush1.msra.mxu0 0.0
  %133 = vmatprep.subr.mxu0 0.0
  %134 = vmatpush1.msra.mxu0 0.0
  %135 = vmatprep.subr.mxu0 0.0
  %136 = vmatpush1.msra.mxu0 0.0
  %137 = vmatprep.subr.mxu0 0.0
  %138 = vmatpush1.msra.mxu0 0.0
  %139 = vmatprep.subr.mxu0 0.0
  %140 = vmatpush1.msra.mxu0 0.0
  %141 = vmatprep.subr.mxu0 0.0
  %142 = vmatpush1.msra.mxu0 0.0
  %143 = vmatprep.mubr.f32.mxu0 0.0
  %144 = vmatmul.mubr.f32.gmra.mrb[0].mxu0 %v56
  %v145 = vpop.f32.mrb[0].mxu0
  %v146 = vadd.f32 %v52, %v145
  %v147 = vpop.f32.mrb[0].mxu0
  %148 = vmatprep.mubr.f32.mxu0 0.0
  %149 = vmatmul.mubr.f32.gmra.mrb[0].mxu0 %v59
  %v150 = vpop.f32.mrb[0].mxu0
  %v151 = vadd.f32 %v52, %v150
  %v152 = vpop.f32.mrb[0].mxu0
  %153 = vmatprep.mubr.f32.mxu0 0.0
  %154 = vmatmul.mubr.f32.gmra.mrb[0].mxu0 %v62
  %v155 = vpop.f32.mrb[0].mxu0
  %v156 = vadd.f32 %v52, %v155
  %v157 = vpop.f32.mrb[0].mxu0
  %158 = vmatprep.mubr.f32.mxu0 0.0
  %159 = vmatmul.mubr.f32.gmra.mrb[0].mxu0 %v65
  %v160 = vpop.f32.mrb[0].mxu0
  %v161 = vadd.f32 %v52, %v160
  %v162 = vpop.f32.mrb[0].mxu0
  %163 = vmatprep.mubr.f32.mxu0 0.0
  %164 = vmatmul.mubr.f32.gmra.mrb[0].mxu0 %v68
  %v165 = vpop.f32.mrb[0].mxu0
  %v166 = vadd.f32 %v52, %v165
  %v167 = vpop.f32.mrb[0].mxu0
  %168 = vmatprep.mubr.f32.mxu0 0.0
  %169 = vmatmul.mubr.f32.gmra.mrb[0].mxu0 %v71
  %v170 = vpop.f32.mrb[0].mxu0
  %v171 = vadd.f32 %v52, %v170
  %v172 = vpop.f32.mrb[0].mxu0
  %173 = vmatprep.mubr.f32.mxu0 0.0
  %174 = vmatmul.mubr.f32.gmra.mrb[0].mxu0 %v74
  %v175 = vpop.f32.mrb[0].mxu0
  %v176 = vadd.f32 %v52, %v175
  %v177 = vpop.f32.mrb[0].mxu0
  %178 = vmatprep.mubr.f32.mxu0 0.0
  %179 = vmatmul.mubr.f32.gmra.mrb[0].mxu0 %v77
  %v180 = vpop.f32.mrb[0].mxu0
  %v181 = vadd.f32 %v52, %v180
  %v182 = vpop.f32.mrb[0].mxu0
  %183 = vdwg.mxu0
  %vm184 = vcmask 392192
  %185 = vst.msk [vmem:[#allocation2] sm:$0xff] %vm184, %v146
  %186 = vst.msk [vmem:[#allocation2 + $0x8] sm:$0xff] %vm184, %v151
  %187 = vst.msk [vmem:[#allocation2 + $0x10] sm:$0xff] %vm184, %v156
  %188 = vst.msk [vmem:[#allocation2 + $0x18] sm:$0xff] %vm184, %v161
  %189 = vst.msk [vmem:[#allocation2 + $0x20] sm:$0xff] %vm184, %v166
  %190 = vst.msk [vmem:[#allocation2 + $0x28] sm:$0xff] %vm184, %v171
  %191 = vst.msk [vmem:[#allocation2 + $0x30] sm:$0xff] %vm184, %v176
  %192 = vst.msk [vmem:[#allocation2 + $0x38] sm:$0xff] %vm184, %v181
  %v193 = vld [vmem:[%s5] sm:$0xff]
  %v194 = vld [vmem:[%s5 + $0x8] sm:$0xff]
  %v195 = vld [vmem:[%s7] sm:$0x1]
  %v197 = vlaneseq
  %v198 = vshrl.u32 %v197, 7
  %v199 = vsub.s32 0, %v198
  %v200 = vrot.slane %v195, %v199
  %202 = vmatprep.subr.mxu0 0.0
  %203 = vmatpush1.msra.mxu0 %v193
  %204 = vmatprep.subr.mxu0 0.0
  %205 = vmatpush1.msra.mxu0 %v194
  %206 = vmatprep.subr.mxu0 0.0
  %207 = vmatpush1.msra.mxu0 0.0
  %208 = vmatprep.subr.mxu0 0.0
  %209 = vmatpush1.msra.mxu0 0.0
  %210 = vmatprep.subr.mxu0 0.0
  %211 = vmatpush1.msra.mxu0 0.0
  %212 = vmatprep.subr.mxu0 0.0
  %213 = vmatpush1.msra.mxu0 0.0
  %214 = vmatprep.subr.mxu0 0.0
  %215 = vmatpush1.msra.mxu0 0.0
  %216 = vmatprep.subr.mxu0 0.0
  %217 = vmatpush1.msra.mxu0 0.0
  %218 = vmatprep.subr.mxu0 0.0
  %219 = vmatpush1.msra.mxu0 0.0
  %220 = vmatprep.subr.mxu0 0.0
  %221 = vmatpush1.msra.mxu0 0.0
  %222 = vmatprep.subr.mxu0 0.0
  %223 = vmatpush1.msra.mxu0 0.0
  %224 = vmatprep.subr.mxu0 0.0
  %225 = vmatpush1.msra.mxu0 0.0
  %226 = vmatprep.subr.mxu0 0.0
  %227 = vmatpush1.msra.mxu0 0.0
  %228 = vmatprep.subr.mxu0 0.0
  %229 = vmatpush1.msra.mxu0 0.0
  %230 = vmatprep.subr.mxu0 0.0
  %231 = vmatpush1.msra.mxu0 0.0
  %232 = vmatprep.subr.mxu0 0.0
  %233 = vmatpush1.msra.mxu0 0.0
  %234 = vmatprep.subr.mxu0 0.0
  %235 = vmatpush1.msra.mxu0 0.0
  %236 = vmatprep.subr.mxu0 0.0
  %237 = vmatpush1.msra.mxu0 0.0
  %238 = vmatprep.subr.mxu0 0.0
  %239 = vmatpush1.msra.mxu0 0.0
  %240 = vmatprep.subr.mxu0 0.0
  %241 = vmatpush1.msra.mxu0 0.0
  %242 = vmatprep.subr.mxu0 0.0
  %243 = vmatpush1.msra.mxu0 0.0
  %244 = vmatprep.subr.mxu0 0.0
  %245 = vmatpush1.msra.mxu0 0.0
  %246 = vmatprep.subr.mxu0 0.0
  %247 = vmatpush1.msra.mxu0 0.0
  %248 = vmatprep.subr.mxu0 0.0
  %249 = vmatpush1.msra.mxu0 0.0
  %250 = vmatprep.subr.mxu0 0.0
  %251 = vmatpush1.msra.mxu0 0.0
  %252 = vmatprep.subr.mxu0 0.0
  %253 = vmatpush1.msra.mxu0 0.0
  %254 = vmatprep.subr.mxu0 0.0
  %255 = vmatpush1.msra.mxu0 0.0
  %256 = vmatprep.subr.mxu0 0.0
  %257 = vmatpush1.msra.mxu0 0.0
  %258 = vmatprep.subr.mxu0 0.0
  %259 = vmatpush1.msra.mxu0 0.0
  %260 = vmatprep.subr.mxu0 0.0
  %261 = vmatpush1.msra.mxu0 0.0
  %262 = vmatprep.subr.mxu0 0.0
  %263 = vmatpush1.msra.mxu0 0.0
  %264 = vmatprep.subr.mxu0 0.0
  %265 = vmatpush1.msra.mxu0 0.0
  %266 = vmatprep.mubr.f32.mxu0 0.0
  %267 = vmatmul.mubr.f32.gmra.mrb[0].mxu0 %v56
  %v268 = vpop.f32.mrb[0].mxu0
  %v269 = vadd.f32 %v200, %v268
  %v270 = vpop.f32.mrb[0].mxu0
  %271 = vmatprep.mubr.f32.mxu0 0.0
  %272 = vmatmul.mubr.f32.gmra.mrb[0].mxu0 %v59
  %v273 = vpop.f32.mrb[0].mxu0
  %v274 = vadd.f32 %v200, %v273
  %v275 = vpop.f32.mrb[0].mxu0
  %276 = vmatprep.mubr.f32.mxu0 0.0
  %277 = vmatmul.mubr.f32.gmra.mrb[0].mxu0 %v62
  %v278 = vpop.f32.mrb[0].mxu0
  %v279 = vadd.f32 %v200, %v278
  %v280 = vpop.f32.mrb[0].mxu0
  %281 = vmatprep.mubr.f32.mxu0 0.0
  %282 = vmatmul.mubr.f32.gmra.mrb[0].mxu0 %v65
  %v283 = vpop.f32.mrb[0].mxu0
  %v284 = vadd.f32 %v200, %v283
  %v285 = vpop.f32.mrb[0].mxu0
  %286 = vmatprep.mubr.f32.mxu0 0.0
  %287 = vmatmul.mubr.f32.gmra.mrb[0].mxu0 %v68
  %v288 = vpop.f32.mrb[0].mxu0
  %v289 = vadd.f32 %v200, %v288
  %v290 = vpop.f32.mrb[0].mxu0
  %291 = vmatprep.mubr.f32.mxu0 0.0
  %292 = vmatmul.mubr.f32.gmra.mrb[0].mxu0 %v71
  %v293 = vpop.f32.mrb[0].mxu0
  %v294 = vadd.f32 %v200, %v293
  %v295 = vpop.f32.mrb[0].mxu0
  %296 = vmatprep.mubr.f32.mxu0 0.0
  %297 = vmatmul.mubr.f32.gmra.mrb[0].mxu0 %v74
  %v298 = vpop.f32.mrb[0].mxu0
  %v299 = vadd.f32 %v200, %v298
  %v300 = vpop.f32.mrb[0].mxu0
  %301 = vmatprep.mubr.f32.mxu0 0.0
  %302 = vmatmul.mubr.f32.gmra.mrb[0].mxu0 %v77
  %v303 = vpop.f32.mrb[0].mxu0
  %v304 = vadd.f32 %v200, %v303
  %v305 = vpop.f32.mrb[0].mxu0
  %306 = vdwg.mxu0
  %307 = vst.msk [vmem:[#allocation3] sm:$0xff] %vm184, %v269
  %308 = vst.msk [vmem:[#allocation3 + $0x8] sm:$0xff] %vm184, %v274
  %309 = vst.msk [vmem:[#allocation3 + $0x10] sm:$0xff] %vm184, %v279
  %310 = vst.msk [vmem:[#allocation3 + $0x18] sm:$0xff] %vm184, %v284
  %311 = vst.msk [vmem:[#allocation3 + $0x20] sm:$0xff] %vm184, %v289
  %312 = vst.msk [vmem:[#allocation3 + $0x28] sm:$0xff] %vm184, %v294
  %313 = vst.msk [vmem:[#allocation3 + $0x30] sm:$0xff] %vm184, %v299
  %314 = vst.msk [vmem:[#allocation3 + $0x38] sm:$0xff] %vm184, %v304
  %v315 = vld [vmem:[%s2] sm:$0xff]
  %v316 = vld [vmem:[%s2 + $0x8] sm:$0xff]
  %v317 = vld [vmem:[%s6] sm:$0xff]
  %v318 = vld [vmem:[%s6 + $0x8] sm:$0xff]
  %v319 = vld [vmem:[%s4] sm:$0x1]
  %v321 = vlaneseq
  %v322 = vshrl.u32 %v321, 7
  %v323 = vsub.s32 0, %v322
  %v324 = vrot.slane %v319, %v323
  %v325 = vld [vmem:[%s8] sm:$0x1]
  %v327 = vlaneseq
  %v328 = vshrl.u32 %v327, 7
  %v329 = vsub.s32 0, %v328
  %v330 = vrot.slane %v325, %v329
  %v331 = vld [vmem:[%s9] sm:$0xff]
  %s332 = scalar_lea.vmem %s9, 8
  %v333 = vld [vmem:[%s332] sm:$0xff]
  %v334 = vld [vmem:[#allocation2] sm:$0xff]
  %s335 = scalar_lea.vmem [#allocation3], 56
  %v336 = vld [vmem:[%s335] sm:$0xff]
  %v338 = vsel %vm54, %v331, 0
  %340 = vmatprep.subr.mxu0 0.0
  %341 = vmatpush1.msra.mxu0 %v315
  %342 = vmatprep.subr.mxu0 0.0
  %343 = vmatpush1.msra.mxu0 %v316
  %344 = vmatprep.subr.mxu0 0.0
  %345 = vmatpush1.msra.mxu0 0.0
  %346 = vmatprep.subr.mxu0 0.0
  %347 = vmatpush1.msra.mxu0 0.0
  %348 = vmatprep.subr.mxu0 0.0
  %349 = vmatpush1.msra.mxu0 0.0
  %350 = vmatprep.subr.mxu0 0.0
  %351 = vmatpush1.msra.mxu0 0.0
  %352 = vmatprep.subr.mxu0 0.0
  %353 = vmatpush1.msra.mxu0 0.0
  %354 = vmatprep.subr.mxu0 0.0
  %355 = vmatpush1.msra.mxu0 0.0
  %356 = vmatprep.subr.mxu0 0.0
  %357 = vmatpush1.msra.mxu0 0.0
  %358 = vmatprep.subr.mxu0 0.0
  %359 = vmatpush1.msra.mxu0 0.0
  %360 = vmatprep.subr.mxu0 0.0
  %361 = vmatpush1.msra.mxu0 0.0
  %362 = vmatprep.subr.mxu0 0.0
  %363 = vmatpush1.msra.mxu0 0.0
  %364 = vmatprep.subr.mxu0 0.0
  %365 = vmatpush1.msra.mxu0 0.0
  %366 = vmatprep.subr.mxu0 0.0
  %367 = vmatpush1.msra.mxu0 0.0
  %368 = vmatprep.subr.mxu0 0.0
  %369 = vmatpush1.msra.mxu0 0.0
  %370 = vmatprep.subr.mxu0 0.0
  %371 = vmatpush1.msra.mxu0 0.0
  %372 = vmatprep.subr.mxu0 0.0
  %373 = vmatpush1.msra.mxu0 0.0
  %374 = vmatprep.subr.mxu0 0.0
  %375 = vmatpush1.msra.mxu0 0.0
  %376 = vmatprep.subr.mxu0 0.0
  %377 = vmatpush1.msra.mxu0 0.0
  %378 = vmatprep.subr.mxu0 0.0
  %379 = vmatpush1.msra.mxu0 0.0
  %380 = vmatprep.subr.mxu0 0.0
  %381 = vmatpush1.msra.mxu0 0.0
  %382 = vmatprep.subr.mxu0 0.0
  %383 = vmatpush1.msra.mxu0 0.0
  %384 = vmatprep.subr.mxu0 0.0
  %385 = vmatpush1.msra.mxu0 0.0
  %386 = vmatprep.subr.mxu0 0.0
  %387 = vmatpush1.msra.mxu0 0.0
  %388 = vmatprep.subr.mxu0 0.0
  %389 = vmatpush1.msra.mxu0 0.0
  %390 = vmatprep.subr.mxu0 0.0
  %391 = vmatpush1.msra.mxu0 0.0
  %392 = vmatprep.subr.mxu0 0.0
  %393 = vmatpush1.msra.mxu0 0.0
  %394 = vmatprep.subr.mxu0 0.0
  %395 = vmatpush1.msra.mxu0 0.0
  %396 = vmatprep.subr.mxu0 0.0
  %397 = vmatpush1.msra.mxu0 0.0
  %398 = vmatprep.subr.mxu0 0.0
  %399 = vmatpush1.msra.mxu0 0.0
  %400 = vmatprep.subr.mxu0 0.0
  %401 = vmatpush1.msra.mxu0 0.0
  %402 = vmatprep.subr.mxu0 0.0
  %403 = vmatpush1.msra.mxu0 0.0
  %404 = vmatprep.mubr.f32.mxu0 0.0
  %405 = vmatmul.mubr.f32.gmra.mrb[0].mxu0 %v338
  %v406 = vpop.f32.mrb[0].mxu0
  %v407 = vadd.f32 0.0, %v406
  %v408 = vpop.f32.mrb[0].mxu0
  %409 = vdwg.mxu0
  %v411 = vsel %vm54, %v333, 0
  %413 = vmatprep.subr.mxu0 0.0
  %414 = vmatpush1.msra.mxu0 %v317
  %415 = vmatprep.subr.mxu0 0.0
  %416 = vmatpush1.msra.mxu0 %v318
  %417 = vmatprep.subr.mxu0 0.0
  %418 = vmatpush1.msra.mxu0 0.0
  %419 = vmatprep.subr.mxu0 0.0
  %420 = vmatpush1.msra.mxu0 0.0
  %421 = vmatprep.subr.mxu0 0.0
  %422 = vmatpush1.msra.mxu0 0.0
  %423 = vmatprep.subr.mxu0 0.0
  %424 = vmatpush1.msra.mxu0 0.0
  %425 = vmatprep.subr.mxu0 0.0
  %426 = vmatpush1.msra.mxu0 0.0
  %427 = vmatprep.subr.mxu0 0.0
  %428 = vmatpush1.msra.mxu0 0.0
  %429 = vmatprep.subr.mxu0 0.0
  %430 = vmatpush1.msra.mxu0 0.0
  %431 = vmatprep.subr.mxu0 0.0
  %432 = vmatpush1.msra.mxu0 0.0
  %433 = vmatprep.subr.mxu0 0.0
  %434 = vmatpush1.msra.mxu0 0.0
  %435 = vmatprep.subr.mxu0 0.0
  %436 = vmatpush1.msra.mxu0 0.0
  %437 = vmatprep.subr.mxu0 0.0
  %438 = vmatpush1.msra.mxu0 0.0
  %439 = vmatprep.subr.mxu0 0.0
  %440 = vmatpush1.msra.mxu0 0.0
  %441 = vmatprep.subr.mxu0 0.0
  %442 = vmatpush1.msra.mxu0 0.0
  %443 = vmatprep.subr.mxu0 0.0
  %444 = vmatpush1.msra.mxu0 0.0
  %445 = vmatprep.subr.mxu0 0.0
  %446 = vmatpush1.msra.mxu0 0.0
  %447 = vmatprep.subr.mxu0 0.0
  %448 = vmatpush1.msra.mxu0 0.0
  %449 = vmatprep.subr.mxu0 0.0
  %450 = vmatpush1.msra.mxu0 0.0
  %451 = vmatprep.subr.mxu0 0.0
  %452 = vmatpush1.msra.mxu0 0.0
  %453 = vmatprep.subr.mxu0 0.0
  %454 = vmatpush1.msra.mxu0 0.0
  %455 = vmatprep.subr.mxu0 0.0
  %456 = vmatpush1.msra.mxu0 0.0
  %457 = vmatprep.subr.mxu0 0.0
  %458 = vmatpush1.msra.mxu0 0.0
  %459 = vmatprep.subr.mxu0 0.0
  %460 = vmatpush1.msra.mxu0 0.0
  %461 = vmatprep.subr.mxu0 0.0
  %462 = vmatpush1.msra.mxu0 0.0
  %463 = vmatprep.subr.mxu0 0.0
  %464 = vmatpush1.msra.mxu0 0.0
  %465 = vmatprep.subr.mxu0 0.0
  %466 = vmatpush1.msra.mxu0 0.0
  %467 = vmatprep.subr.mxu0 0.0
  %468 = vmatpush1.msra.mxu0 0.0
  %469 = vmatprep.subr.mxu0 0.0
  %470 = vmatpush1.msra.mxu0 0.0
  %471 = vmatprep.subr.mxu0 0.0
  %472 = vmatpush1.msra.mxu0 0.0
  %473 = vmatprep.subr.mxu0 0.0
  %474 = vmatpush1.msra.mxu0 0.0
  %475 = vmatprep.subr.mxu0 0.0
  %476 = vmatpush1.msra.mxu0 0.0
  %477 = vmatprep.mubr.f32.mxu0 0.0
  %478 = vmatmul.mubr.f32.gmra.mrb[0].mxu0 %v411
  %v479 = vpop.f32.mrb[0].mxu0
  %v480 = vadd.f32 0.0, %v479
  %v481 = vpop.f32.mrb[0].mxu0
  %482 = vdwg.mxu0
  %v483 = vadd.f32 %v334, %v407
  %v484 = vxor.u32 %v483, 2147483648
  %v485 = vmul.f32 %v484, 1.442695
  %v486 = vpow.pop %v485
  %v487 = vadd.f32 %v486, 1.0
  %v488 = vrcp.pop %v487
  %v489 = vmul.f32 1.0, %v488
  %490 = vrot.lane.b32.xlu0 %v324, 32
  %v491 = vpop.permute.xlu0 %490
  %v493 = vadd.f32 %v407, %v491
  %495 = vrot.lane.b32.xlu0 %v493, 96
  %v496 = vpop.permute.xlu0 %495
  %v498 = vmul.f32 %v489, %v496
  %500 = vrot.lane.b32.xlu0 %v498, 32
  %v501 = vpop.permute.xlu0 %500
  %v503 = vadd.f32 %v334, %v501
  %v504 = vtanh.pop %v503
  %v505 = vsub.f32 1.0, %v489
  %507 = vrot.lane.b32.xlu0 %v504, 112
  %v508 = vpop.permute.xlu0 %507
  %v510 = vmul.f32 %v505, %v508
  %511 = vrot.lane.b32.xlu0 %v331, 16
  %v512 = vpop.permute.xlu0 %511
  %v514 = vmul.f32 %v489, %v512
  %v515 = vadd.f32 %v510, %v514
  %v516 = vadd.f32 %v336, %v480
  %v517 = vxor.u32 %v516, 2147483648
  %v518 = vmul.f32 %v517, 1.442695
  %v519 = vpow.pop %v518
  %v520 = vadd.f32 %v519, 1.0
  %v521 = vrcp.pop %v520
  %v522 = vmul.f32 1.0, %v521
  %523 = vrot.lane.b32.xlu0 %v330, 32
  %v524 = vpop.permute.xlu0 %523
  %v526 = vadd.f32 %v480, %v524
  %528 = vrot.lane.b32.xlu0 %v526, 96
  %v529 = vpop.permute.xlu0 %528
  %v531 = vmul.f32 %v522, %v529
  %533 = vrot.lane.b32.xlu0 %v531, 32
  %v534 = vpop.permute.xlu0 %533
  %v536 = vadd.f32 %v336, %v534
  %v537 = vtanh.pop %v536
  %v538 = vsub.f32 1.0, %v522
  %540 = vrot.lane.b32.xlu0 %v537, 112
  %v541 = vpop.permute.xlu0 %540
  %v543 = vmul.f32 %v538, %v541
  %544 = vrot.lane.b32.xlu0 %v333, 16
  %v545 = vpop.permute.xlu0 %544
  %v547 = vmul.f32 %v522, %v545
  %v548 = vadd.f32 %v543, %v547
  %550 = vrot.lane.b32.xlu0 %v515, 112
  %v551 = vpop.permute.xlu0 %550
  %553 = vst.msk [vmem:[%s10] sm:$0xff] %vm54, %v551
  %s554 = scalar_lea.vmem %s10, 56
  %vm555 = vcmask 261248
  %556 = vst.msk [vmem:[%s554] sm:$0xff] %vm555, %v548
  %s557 = scalar_lea.vmem [#allocation2], 8
  %v558 = vld [vmem:[%s557] sm:$0xff]
  %s559 = scalar_lea.vmem [#allocation3], 48
  %v560 = vld [vmem:[%s559] sm:$0xff]
  %v561 = vsel %vm54, %v551, 0
  %563 = vmatprep.subr.mxu0 0.0
  %564 = vmatpush1.msra.mxu0 %v315
  %565 = vmatprep.subr.mxu0 0.0
  %566 = vmatpush1.msra.mxu0 %v316
  %567 = vmatprep.subr.mxu0 0.0
  %568 = vmatpush1.msra.mxu0 0.0
  %569 = vmatprep.subr.mxu0 0.0
  %570 = vmatpush1.msra.mxu0 0.0
  %571 = vmatprep.subr.mxu0 0.0
  %572 = vmatpush1.msra.mxu0 0.0
  %573 = vmatprep.subr.mxu0 0.0
  %574 = vmatpush1.msra.mxu0 0.0
  %575 = vmatprep.subr.mxu0 0.0
  %576 = vmatpush1.msra.mxu0 0.0
  %577 = vmatprep.subr.mxu0 0.0
  %578 = vmatpush1.msra.mxu0 0.0
  %579 = vmatprep.subr.mxu0 0.0
  %580 = vmatpush1.msra.mxu0 0.0
  %581 = vmatprep.subr.mxu0 0.0
  %582 = vmatpush1.msra.mxu0 0.0
  %583 = vmatprep.subr.mxu0 0.0
  %584 = vmatpush1.msra.mxu0 0.0
  %585 = vmatprep.subr.mxu0 0.0
  %586 = vmatpush1.msra.mxu0 0.0
  %587 = vmatprep.subr.mxu0 0.0
  %588 = vmatpush1.msra.mxu0 0.0
  %589 = vmatprep.subr.mxu0 0.0
  %590 = vmatpush1.msra.mxu0 0.0
  %591 = vmatprep.subr.mxu0 0.0
  %592 = vmatpush1.msra.mxu0 0.0
  %593 = vmatprep.subr.mxu0 0.0
  %594 = vmatpush1.msra.mxu0 0.0
  %595 = vmatprep.subr.mxu0 0.0
  %596 = vmatpush1.msra.mxu0 0.0
  %597 = vmatprep.subr.mxu0 0.0
  %598 = vmatpush1.msra.mxu0 0.0
  %599 = vmatprep.subr.mxu0 0.0
  %600 = vmatpush1.msra.mxu0 0.0
  %601 = vmatprep.subr.mxu0 0.0
  %602 = vmatpush1.msra.mxu0 0.0
  %603 = vmatprep.subr.mxu0 0.0
  %604 = vmatpush1.msra.mxu0 0.0
  %605 = vmatprep.subr.mxu0 0.0
  %606 = vmatpush1.msra.mxu0 0.0
  %607 = vmatprep.subr.mxu0 0.0
  %608 = vmatpush1.msra.mxu0 0.0
  %609 = vmatprep.subr.mxu0 0.0
  %610 = vmatpush1.msra.mxu0 0.0
  %611 = vmatprep.subr.mxu0 0.0
  %612 = vmatpush1.msra.mxu0 0.0
  %613 = vmatprep.subr.mxu0 0.0
  %614 = vmatpush1.msra.mxu0 0.0
  %615 = vmatprep.subr.mxu0 0.0
  %616 = vmatpush1.msra.mxu0 0.0
  %617 = vmatprep.subr.mxu0 0.0
  %618 = vmatpush1.msra.mxu0 0.0
  %619 = vmatprep.subr.mxu0 0.0
  %620 = vmatpush1.msra.mxu0 0.0
  %621 = vmatprep.subr.mxu0 0.0
  %622 = vmatpush1.msra.mxu0 0.0
  %623 = vmatprep.subr.mxu0 0.0
  %624 = vmatpush1.msra.mxu0 0.0
  %625 = vmatprep.subr.mxu0 0.0
  %626 = vmatpush1.msra.mxu0 0.0
  %627 = vmatprep.mubr.f32.mxu0 0.0
  %628 = vmatmul.mubr.f32.gmra.mrb[0].mxu0 %v561
  %v629 = vpop.f32.mrb[0].mxu0
  %v630 = vadd.f32 0.0, %v629
  %v631 = vpop.f32.mrb[0].mxu0
  %632 = vdwg.mxu0
  %634 = vrot.lane.b32.xlu0 %v548, 112
  %v635 = vpop.permute.xlu0 %634
  %v636 = vsel %vm54, %v635, 0
  %638 = vmatprep.subr.mxu0 0.0
  %639 = vmatpush1.msra.mxu0 %v317
  %640 = vmatprep.subr.mxu0 0.0
  %641 = vmatpush1.msra.mxu0 %v318
  %642 = vmatprep.subr.mxu0 0.0
  %643 = vmatpush1.msra.mxu0 0.0
  %644 = vmatprep.subr.mxu0 0.0
  %645 = vmatpush1.msra.mxu0 0.0
  %646 = vmatprep.subr.mxu0 0.0
  %647 = vmatpush1.msra.mxu0 0.0
  %648 = vmatprep.subr.mxu0 0.0
  %649 = vmatpush1.msra.mxu0 0.0
  %650 = vmatprep.subr.mxu0 0.0
  %651 = vmatpush1.msra.mxu0 0.0
  %652 = vmatprep.subr.mxu0 0.0
  %653 = vmatpush1.msra.mxu0 0.0
  %654 = vmatprep.subr.mxu0 0.0
  %655 = vmatpush1.msra.mxu0 0.0
  %656 = vmatprep.subr.mxu0 0.0
  %657 = vmatpush1.msra.mxu0 0.0
  %658 = vmatprep.subr.mxu0 0.0
  %659 = vmatpush1.msra.mxu0 0.0
  %660 = vmatprep.subr.mxu0 0.0
  %661 = vmatpush1.msra.mxu0 0.0
  %662 = vmatprep.subr.mxu0 0.0
  %663 = vmatpush1.msra.mxu0 0.0
  %664 = vmatprep.subr.mxu0 0.0
  %665 = vmatpush1.msra.mxu0 0.0
  %666 = vmatprep.subr.mxu0 0.0
  %667 = vmatpush1.msra.mxu0 0.0
  %668 = vmatprep.subr.mxu0 0.0
  %669 = vmatpush1.msra.mxu0 0.0
  %670 = vmatprep.subr.mxu0 0.0
  %671 = vmatpush1.msra.mxu0 0.0
  %672 = vmatprep.subr.mxu0 0.0
  %673 = vmatpush1.msra.mxu0 0.0
  %674 = vmatprep.subr.mxu0 0.0
  %675 = vmatpush1.msra.mxu0 0.0
  %676 = vmatprep.subr.mxu0 0.0
  %677 = vmatpush1.msra.mxu0 0.0
  %678 = vmatprep.subr.mxu0 0.0
  %679 = vmatpush1.msra.mxu0 0.0
  %680 = vmatprep.subr.mxu0 0.0
  %681 = vmatpush1.msra.mxu0 0.0
  %682 = vmatprep.subr.mxu0 0.0
  %683 = vmatpush1.msra.mxu0 0.0
  %684 = vmatprep.subr.mxu0 0.0
  %685 = vmatpush1.msra.mxu0 0.0
  %686 = vmatprep.subr.mxu0 0.0
  %687 = vmatpush1.msra.mxu0 0.0
  %688 = vmatprep.subr.mxu0 0.0
  %689 = vmatpush1.msra.mxu0 0.0
  %690 = vmatprep.subr.mxu0 0.0
  %691 = vmatpush1.msra.mxu0 0.0
  %692 = vmatprep.subr.mxu0 0.0
  %693 = vmatpush1.msra.mxu0 0.0
  %694 = vmatprep.subr.mxu0 0.0
  %695 = vmatpush1.msra.mxu0 0.0
  %696 = vmatprep.subr.mxu0 0.0
  %697 = vmatpush1.msra.mxu0 0.0
  %698 = vmatprep.subr.mxu0 0.0
  %699 = vmatpush1.msra.mxu0 0.0
  %700 = vmatprep.subr.mxu0 0.0
  %701 = vmatpush1.msra.mxu0 0.0
  %702 = vmatprep.mubr.f32.mxu0 0.0
  %703 = vmatmul.mubr.f32.gmra.mrb[0].mxu0 %v636
  %v704 = vpop.f32.mrb[0].mxu0
  %v705 = vadd.f32 0.0, %v704
  %v706 = vpop.f32.mrb[0].mxu0
  %707 = vdwg.mxu0
  %v708 = vadd.f32 %v558, %v630
  %v709 = vxor.u32 %v708, 2147483648
  %v710 = vmul.f32 %v709, 1.442695
  %v711 = vpow.pop %v710
  %v712 = vadd.f32 %v711, 1.0
  %v713 = vrcp.pop %v712
  %v714 = vmul.f32 1.0, %v713
  %v715 = vadd.f32 %v630, %v491
  %717 = vrot.lane.b32.xlu0 %v715, 96
  %v718 = vpop.permute.xlu0 %717
  %v720 = vmul.f32 %v714, %v718
  %722 = vrot.lane.b32.xlu0 %v720, 32
  %v723 = vpop.permute.xlu0 %722
  %v725 = vadd.f32 %v558, %v723
  %v726 = vtanh.pop %v725
  %v727 = vsub.f32 1.0, %v714
  %729 = vrot.lane.b32.xlu0 %v726, 112
  %v730 = vpop.permute.xlu0 %729
  %v732 = vmul.f32 %v727, %v730
  %v733 = vmul.f32 %v714, %v515
  %v734 = vadd.f32 %v732, %v733
  %v735 = vadd.f32 %v560, %v705
  %v736 = vxor.u32 %v735, 2147483648
  %v737 = vmul.f32 %v736, 1.442695
  %v738 = vpow.pop %v737
  %v739 = vadd.f32 %v738, 1.0
  %v740 = vrcp.pop %v739
  %v741 = vmul.f32 1.0, %v740
  %v742 = vadd.f32 %v705, %v524
  %744 = vrot.lane.b32.xlu0 %v742, 96
  %v745 = vpop.permute.xlu0 %744
  %v747 = vmul.f32 %v741, %v745
  %749 = vrot.lane.b32.xlu0 %v747, 32
  %v750 = vpop.permute.xlu0 %749
  %v752 = vadd.f32 %v560, %v750
  %v753 = vtanh.pop %v752
  %v754 = vsub.f32 1.0, %v741
  %756 = vrot.lane.b32.xlu0 %v753, 112
  %v757 = vpop.permute.xlu0 %756
  %v759 = vmul.f32 %v754, %v757
  %v760 = vmul.f32 %v741, %v548
  %v761 = vadd.f32 %v759, %v760
  %763 = vrot.lane.b32.xlu0 %v734, 112
  %v764 = vpop.permute.xlu0 %763
  %s766 = scalar_lea.vmem %s10, 8
  %767 = vst.msk [vmem:[%s766] sm:$0xff] %vm54, %v764
  %s768 = scalar_lea.vmem %s10, 48
  %769 = vst.msk [vmem:[%s768] sm:$0xff] %vm555, %v761
  %s770 = scalar_lea.vmem [#allocation2], 16
  %v771 = vld [vmem:[%s770] sm:$0xff]
  %s772 = scalar_lea.vmem [#allocation3], 40
  %v773 = vld [vmem:[%s772] sm:$0xff]
  %v774 = vsel %vm54, %v764, 0
  %776 = vmatprep.subr.mxu0 0.0
  %777 = vmatpush1.msra.mxu0 %v315
  %778 = vmatprep.subr.mxu0 0.0
  %779 = vmatpush1.msra.mxu0 %v316
  %780 = vmatprep.subr.mxu0 0.0
  %781 = vmatpush1.msra.mxu0 0.0
  %782 = vmatprep.subr.mxu0 0.0
  %783 = vmatpush1.msra.mxu0 0.0
  %784 = vmatprep.subr.mxu0 0.0
  %785 = vmatpush1.msra.mxu0 0.0
  %786 = vmatprep.subr.mxu0 0.0
  %787 = vmatpush1.msra.mxu0 0.0
  %788 = vmatprep.subr.mxu0 0.0
  %789 = vmatpush1.msra.mxu0 0.0
  %790 = vmatprep.subr.mxu0 0.0
  %791 = vmatpush1.msra.mxu0 0.0
  %792 = vmatprep.subr.mxu0 0.0
  %793 = vmatpush1.msra.mxu0 0.0
  %794 = vmatprep.subr.mxu0 0.0
  %795 = vmatpush1.msra.mxu0 0.0
  %796 = vmatprep.subr.mxu0 0.0
  %797 = vmatpush1.msra.mxu0 0.0
  %798 = vmatprep.subr.mxu0 0.0
  %799 = vmatpush1.msra.mxu0 0.0
  %800 = vmatprep.subr.mxu0 0.0
  %801 = vmatpush1.msra.mxu0 0.0
  %802 = vmatprep.subr.mxu0 0.0
  %803 = vmatpush1.msra.mxu0 0.0
  %804 = vmatprep.subr.mxu0 0.0
  %805 = vmatpush1.msra.mxu0 0.0
  %806 = vmatprep.subr.mxu0 0.0
  %807 = vmatpush1.msra.mxu0 0.0
  %808 = vmatprep.subr.mxu0 0.0
  %809 = vmatpush1.msra.mxu0 0.0
  %810 = vmatprep.subr.mxu0 0.0
  %811 = vmatpush1.msra.mxu0 0.0
  %812 = vmatprep.subr.mxu0 0.0
  %813 = vmatpush1.msra.mxu0 0.0
  %814 = vmatprep.subr.mxu0 0.0
  %815 = vmatpush1.msra.mxu0 0.0
  %816 = vmatprep.subr.mxu0 0.0
  %817 = vmatpush1.msra.mxu0 0.0
  %818 = vmatprep.subr.mxu0 0.0
  %819 = vmatpush1.msra.mxu0 0.0
  %820 = vmatprep.subr.mxu0 0.0
  %821 = vmatpush1.msra.mxu0 0.0
  %822 = vmatprep.subr.mxu0 0.0
  %823 = vmatpush1.msra.mxu0 0.0
  %824 = vmatprep.subr.mxu0 0.0
  %825 = vmatpush1.msra.mxu0 0.0
  %826 = vmatprep.subr.mxu0 0.0
  %827 = vmatpush1.msra.mxu0 0.0
  %828 = vmatprep.subr.mxu0 0.0
  %829 = vmatpush1.msra.mxu0 0.0
  %830 = vmatprep.subr.mxu0 0.0
  %831 = vmatpush1.msra.mxu0 0.0
  %832 = vmatprep.subr.mxu0 0.0
  %833 = vmatpush1.msra.mxu0 0.0
  %834 = vmatprep.subr.mxu0 0.0
  %835 = vmatpush1.msra.mxu0 0.0
  %836 = vmatprep.subr.mxu0 0.0
  %837 = vmatpush1.msra.mxu0 0.0
  %838 = vmatprep.subr.mxu0 0.0
  %839 = vmatpush1.msra.mxu0 0.0
  %840 = vmatprep.mubr.f32.mxu0 0.0
  %841 = vmatmul.mubr.f32.gmra.mrb[0].mxu0 %v774
  %v842 = vpop.f32.mrb[0].mxu0
  %v843 = vadd.f32 0.0, %v842
  %v844 = vpop.f32.mrb[0].mxu0
  %845 = vdwg.mxu0
  %847 = vrot.lane.b32.xlu0 %v761, 112
  %v848 = vpop.permute.xlu0 %847
  %v849 = vsel %vm54, %v848, 0
  %851 = vmatprep.subr.mxu0 0.0
  %852 = vmatpush1.msra.mxu0 %v317
  %853 = vmatprep.subr.mxu0 0.0
  %854 = vmatpush1.msra.mxu0 %v318
  %855 = vmatprep.subr.mxu0 0.0
  %856 = vmatpush1.msra.mxu0 0.0
  %857 = vmatprep.subr.mxu0 0.0
  %858 = vmatpush1.msra.mxu0 0.0
  %859 = vmatprep.subr.mxu0 0.0
  %860 = vmatpush1.msra.mxu0 0.0
  %861 = vmatprep.subr.mxu0 0.0
  %862 = vmatpush1.msra.mxu0 0.0
  %863 = vmatprep.subr.mxu0 0.0
  %864 = vmatpush1.msra.mxu0 0.0
  %865 = vmatprep.subr.mxu0 0.0
  %866 = vmatpush1.msra.mxu0 0.0
  %867 = vmatprep.subr.mxu0 0.0
  %868 = vmatpush1.msra.mxu0 0.0
  %869 = vmatprep.subr.mxu0 0.0
  %870 = vmatpush1.msra.mxu0 0.0
  %871 = vmatprep.subr.mxu0 0.0
  %872 = vmatpush1.msra.mxu0 0.0
  %873 = vmatprep.subr.mxu0 0.0
  %874 = vmatpush1.msra.mxu0 0.0
  %875 = vmatprep.subr.mxu0 0.0
  %876 = vmatpush1.msra.mxu0 0.0
  %877 = vmatprep.subr.mxu0 0.0
  %878 = vmatpush1.msra.mxu0 0.0
  %879 = vmatprep.subr.mxu0 0.0
  %880 = vmatpush1.msra.mxu0 0.0
  %881 = vmatprep.subr.mxu0 0.0
  %882 = vmatpush1.msra.mxu0 0.0
  %883 = vmatprep.subr.mxu0 0.0
  %884 = vmatpush1.msra.mxu0 0.0
  %885 = vmatprep.subr.mxu0 0.0
  %886 = vmatpush1.msra.mxu0 0.0
  %887 = vmatprep.subr.mxu0 0.0
  %888 = vmatpush1.msra.mxu0 0.0
  %889 = vmatprep.subr.mxu0 0.0
  %890 = vmatpush1.msra.mxu0 0.0
  %891 = vmatprep.subr.mxu0 0.0
  %892 = vmatpush1.msra.mxu0 0.0
  %893 = vmatprep.subr.mxu0 0.0
  %894 = vmatpush1.msra.mxu0 0.0
  %895 = vmatprep.subr.mxu0 0.0
  %896 = vmatpush1.msra.mxu0 0.0
  %897 = vmatprep.subr.mxu0 0.0
  %898 = vmatpush1.msra.mxu0 0.0
  %899 = vmatprep.subr.mxu0 0.0
  %900 = vmatpush1.msra.mxu0 0.0
  %901 = vmatprep.subr.mxu0 0.0
  %902 = vmatpush1.msra.mxu0 0.0
  %903 = vmatprep.subr.mxu0 0.0
  %904 = vmatpush1.msra.mxu0 0.0
  %905 = vmatprep.subr.mxu0 0.0
  %906 = vmatpush1.msra.mxu0 0.0
  %907 = vmatprep.subr.mxu0 0.0
  %908 = vmatpush1.msra.mxu0 0.0
  %909 = vmatprep.subr.mxu0 0.0
  %910 = vmatpush1.msra.mxu0 0.0
  %911 = vmatprep.subr.mxu0 0.0
  %912 = vmatpush1.msra.mxu0 0.0
  %913 = vmatprep.subr.mxu0 0.0
  %914 = vmatpush1.msra.mxu0 0.0
  %915 = vmatprep.mubr.f32.mxu0 0.0
  %916 = vmatmul.mubr.f32.gmra.mrb[0].mxu0 %v849
  %v917 = vpop.f32.mrb[0].mxu0
  %v918 = vadd.f32 0.0, %v917
  %v919 = vpop.f32.mrb[0].mxu0
  %920 = vdwg.mxu0
  %v921 = vadd.f32 %v771, %v843
  %v922 = vxor.u32 %v921, 2147483648
  %v923 = vmul.f32 %v922, 1.442695
  %v924 = vpow.pop %v923
  %v925 = vadd.f32 %v924, 1.0
  %v926 = vrcp.pop %v925
  %v927 = vmul.f32 1.0, %v926
  %v928 = vadd.f32 %v843, %v491
  %930 = vrot.lane.b32.xlu0 %v928, 96
  %v931 = vpop.permute.xlu0 %930
  %v933 = vmul.f32 %v927, %v931
  %935 = vrot.lane.b32.xlu0 %v933, 32
  %v936 = vpop.permute.xlu0 %935
  %v938 = vadd.f32 %v771, %v936
  %v939 = vtanh.pop %v938
  %v940 = vsub.f32 1.0, %v927
  %942 = vrot.lane.b32.xlu0 %v939, 112
  %v943 = vpop.permute.xlu0 %942
  %v945 = vmul.f32 %v940, %v943
  %v946 = vmul.f32 %v927, %v734
  %v947 = vadd.f32 %v945, %v946
  %v948 = vadd.f32 %v773, %v918
  %v949 = vxor.u32 %v948, 2147483648
  %v950 = vmul.f32 %v949, 1.442695
  %v951 = vpow.pop %v950
  %v952 = vadd.f32 %v951, 1.0
  %v953 = vrcp.pop %v952
  %v954 = vmul.f32 1.0, %v953
  %v955 = vadd.f32 %v918, %v524
  %957 = vrot.lane.b32.xlu0 %v955, 96
  %v958 = vpop.permute.xlu0 %957
  %v960 = vmul.f32 %v954, %v958
  %962 = vrot.lane.b32.xlu0 %v960, 32
  %v963 = vpop.permute.xlu0 %962
  %v965 = vadd.f32 %v773, %v963
  %v966 = vtanh.pop %v965
  %v967 = vsub.f32 1.0, %v954
  %969 = vrot.lane.b32.xlu0 %v966, 112
  %v970 = vpop.permute.xlu0 %969
  %v972 = vmul.f32 %v967, %v970
  %v973 = vmul.f32 %v954, %v761
  %v974 = vadd.f32 %v972, %v973
  %976 = vrot.lane.b32.xlu0 %v947, 112
  %v977 = vpop.permute.xlu0 %976
  %s979 = scalar_lea.vmem %s10, 16
  %980 = vst.msk [vmem:[%s979] sm:$0xff] %vm54, %v977
  %s981 = scalar_lea.vmem %s10, 40
  %982 = vst.msk [vmem:[%s981] sm:$0xff] %vm555, %v974
  %s983 = scalar_lea.vmem [#allocation2], 24
  %v984 = vld [vmem:[%s983] sm:$0xff]
  %s985 = scalar_lea.vmem [#allocation3], 32
  %v986 = vld [vmem:[%s985] sm:$0xff]
  %v987 = vsel %vm54, %v977, 0
  %989 = vmatprep.subr.mxu0 0.0
  %990 = vmatpush1.msra.mxu0 %v315
  %991 = vmatprep.subr.mxu0 0.0
  %992 = vmatpush1.msra.mxu0 %v316
  %993 = vmatprep.subr.mxu0 0.0
  %994 = vmatpush1.msra.mxu0 0.0
  %995 = vmatprep.subr.mxu0 0.0
  %996 = vmatpush1.msra.mxu0 0.0
  %997 = vmatprep.subr.mxu0 0.0
  %998 = vmatpush1.msra.mxu0 0.0
  %999 = vmatprep.subr.mxu0 0.0
  %1000 = vmatpush1.msra.mxu0 0.0
  %1001 = vmatprep.subr.mxu0 0.0
  %1002 = vmatpush1.msra.mxu0 0.0
  %1003 = vmatprep.subr.mxu0 0.0
  %1004 = vmatpush1.msra.mxu0 0.0
  %1005 = vmatprep.subr.mxu0 0.0
  %1006 = vmatpush1.msra.mxu0 0.0
  %1007 = vmatprep.subr.mxu0 0.0
  %1008 = vmatpush1.msra.mxu0 0.0
  %1009 = vmatprep.subr.mxu0 0.0
  %1010 = vmatpush1.msra.mxu0 0.0
  %1011 = vmatprep.subr.mxu0 0.0
  %1012 = vmatpush1.msra.mxu0 0.0
  %1013 = vmatprep.subr.mxu0 0.0
  %1014 = vmatpush1.msra.mxu0 0.0
  %1015 = vmatprep.subr.mxu0 0.0
  %1016 = vmatpush1.msra.mxu0 0.0
  %1017 = vmatprep.subr.mxu0 0.0
  %1018 = vmatpush1.msra.mxu0 0.0
  %1019 = vmatprep.subr.mxu0 0.0
  %1020 = vmatpush1.msra.mxu0 0.0
  %1021 = vmatprep.subr.mxu0 0.0
  %1022 = vmatpush1.msra.mxu0 0.0
  %1023 = vmatprep.subr.mxu0 0.0
  %1024 = vmatpush1.msra.mxu0 0.0
  %1025 = vmatprep.subr.mxu0 0.0
  %1026 = vmatpush1.msra.mxu0 0.0
  %1027 = vmatprep.subr.mxu0 0.0
  %1028 = vmatpush1.msra.mxu0 0.0
  %1029 = vmatprep.subr.mxu0 0.0
  %1030 = vmatpush1.msra.mxu0 0.0
  %1031 = vmatprep.subr.mxu0 0.0
  %1032 = vmatpush1.msra.mxu0 0.0
  %1033 = vmatprep.subr.mxu0 0.0
  %1034 = vmatpush1.msra.mxu0 0.0
  %1035 = vmatprep.subr.mxu0 0.0
  %1036 = vmatpush1.msra.mxu0 0.0
  %1037 = vmatprep.subr.mxu0 0.0
  %1038 = vmatpush1.msra.mxu0 0.0
  %1039 = vmatprep.subr.mxu0 0.0
  %1040 = vmatpush1.msra.mxu0 0.0
  %1041 = vmatprep.subr.mxu0 0.0
  %1042 = vmatpush1.msra.mxu0 0.0
  %1043 = vmatprep.subr.mxu0 0.0
  %1044 = vmatpush1.msra.mxu0 0.0
  %1045 = vmatprep.subr.mxu0 0.0
  %1046 = vmatpush1.msra.mxu0 0.0
  %1047 = vmatprep.subr.mxu0 0.0
  %1048 = vmatpush1.msra.mxu0 0.0
  %1049 = vmatprep.subr.mxu0 0.0
  %1050 = vmatpush1.msra.mxu0 0.0
  %1051 = vmatprep.subr.mxu0 0.0
  %1052 = vmatpush1.msra.mxu0 0.0
  %1053 = vmatprep.mubr.f32.mxu0 0.0
  %1054 = vmatmul.mubr.f32.gmra.mrb[0].mxu0 %v987
  %v1055 = vpop.f32.mrb[0].mxu0
  %v1056 = vadd.f32 0.0, %v1055
  %v1057 = vpop.f32.mrb[0].mxu0
  %1058 = vdwg.mxu0
  %1060 = vrot.lane.b32.xlu0 %v974, 112
  %v1061 = vpop.permute.xlu0 %1060
  %v1062 = vsel %vm54, %v1061, 0
  %1064 = vmatprep.subr.mxu0 0.0
  %1065 = vmatpush1.msra.mxu0 %v317
  %1066 = vmatprep.subr.mxu0 0.0
  %1067 = vmatpush1.msra.mxu0 %v318
  %1068 = vmatprep.subr.mxu0 0.0
  %1069 = vmatpush1.msra.mxu0 0.0
  %1070 = vmatprep.subr.mxu0 0.0
  %1071 = vmatpush1.msra.mxu0 0.0
  %1072 = vmatprep.subr.mxu0 0.0
  %1073 = vmatpush1.msra.mxu0 0.0
  %1074 = vmatprep.subr.mxu0 0.0
  %1075 = vmatpush1.msra.mxu0 0.0
  %1076 = vmatprep.subr.mxu0 0.0
  %1077 = vmatpush1.msra.mxu0 0.0
  %1078 = vmatprep.subr.mxu0 0.0
  %1079 = vmatpush1.msra.mxu0 0.0
  %1080 = vmatprep.subr.mxu0 0.0
  %1081 = vmatpush1.msra.mxu0 0.0
  %1082 = vmatprep.subr.mxu0 0.0
  %1083 = vmatpush1.msra.mxu0 0.0
  %1084 = vmatprep.subr.mxu0 0.0
  %1085 = vmatpush1.msra.mxu0 0.0
  %1086 = vmatprep.subr.mxu0 0.0
  %1087 = vmatpush1.msra.mxu0 0.0
  %1088 = vmatprep.subr.mxu0 0.0
  %1089 = vmatpush1.msra.mxu0 0.0
  %1090 = vmatprep.subr.mxu0 0.0
  %1091 = vmatpush1.msra.mxu0 0.0
  %1092 = vmatprep.subr.mxu0 0.0
  %1093 = vmatpush1.msra.mxu0 0.0
  %1094 = vmatprep.subr.mxu0 0.0
  %1095 = vmatpush1.msra.mxu0 0.0
  %1096 = vmatprep.subr.mxu0 0.0
  %1097 = vmatpush1.msra.mxu0 0.0
  %1098 = vmatprep.subr.mxu0 0.0
  %1099 = vmatpush1.msra.mxu0 0.0
  %1100 = vmatprep.subr.mxu0 0.0
  %1101 = vmatpush1.msra.mxu0 0.0
  %1102 = vmatprep.subr.mxu0 0.0
  %1103 = vmatpush1.msra.mxu0 0.0
  %1104 = vmatprep.subr.mxu0 0.0
  %1105 = vmatpush1.msra.mxu0 0.0
  %1106 = vmatprep.subr.mxu0 0.0
  %1107 = vmatpush1.msra.mxu0 0.0
  %1108 = vmatprep.subr.mxu0 0.0
  %1109 = vmatpush1.msra.mxu0 0.0
  %1110 = vmatprep.subr.mxu0 0.0
  %1111 = vmatpush1.msra.mxu0 0.0
  %1112 = vmatprep.subr.mxu0 0.0
  %1113 = vmatpush1.msra.mxu0 0.0
  %1114 = vmatprep.subr.mxu0 0.0
  %1115 = vmatpush1.msra.mxu0 0.0
  %1116 = vmatprep.subr.mxu0 0.0
  %1117 = vmatpush1.msra.mxu0 0.0
  %1118 = vmatprep.subr.mxu0 0.0
  %1119 = vmatpush1.msra.mxu0 0.0
  %1120 = vmatprep.subr.mxu0 0.0
  %1121 = vmatpush1.msra.mxu0 0.0
  %1122 = vmatprep.subr.mxu0 0.0
  %1123 = vmatpush1.msra.mxu0 0.0
  %1124 = vmatprep.subr.mxu0 0.0
  %1125 = vmatpush1.msra.mxu0 0.0
  %1126 = vmatprep.subr.mxu0 0.0
  %1127 = vmatpush1.msra.mxu0 0.0
  %1128 = vmatprep.mubr.f32.mxu0 0.0
  %1129 = vmatmul.mubr.f32.gmra.mrb[0].mxu0 %v1062
  %v1130 = vpop.f32.mrb[0].mxu0
  %v1131 = vadd.f32 0.0, %v1130
  %v1132 = vpop.f32.mrb[0].mxu0
  %1133 = vdwg.mxu0
  %v1134 = vadd.f32 %v984, %v1056
  %v1135 = vxor.u32 %v1134, 2147483648
  %v1136 = vmul.f32 %v1135, 1.442695
  %v1137 = vpow.pop %v1136
  %v1138 = vadd.f32 %v1137, 1.0
  %v1139 = vrcp.pop %v1138
  %v1140 = vmul.f32 1.0, %v1139
  %v1141 = vadd.f32 %v1056, %v491
  %1143 = vrot.lane.b32.xlu0 %v1141, 96
  %v1144 = vpop.permute.xlu0 %1143
  %v1146 = vmul.f32 %v1140, %v1144
  %1148 = vrot.lane.b32.xlu0 %v1146, 32
  %v1149 = vpop.permute.xlu0 %1148
  %v1151 = vadd.f32 %v984, %v1149
  %v1152 = vtanh.pop %v1151
  %v1153 = vsub.f32 1.0, %v1140
  %1155 = vrot.lane.b32.xlu0 %v1152, 112
  %v1156 = vpop.permute.xlu0 %1155
  %v1158 = vmul.f32 %v1153, %v1156
  %v1159 = vmul.f32 %v1140, %v947
  %v1160 = vadd.f32 %v1158, %v1159
  %v1161 = vadd.f32 %v986, %v1131
  %v1162 = vxor.u32 %v1161, 2147483648
  %v1163 = vmul.f32 %v1162, 1.442695
  %v1164 = vpow.pop %v1163
  %v1165 = vadd.f32 %v1164, 1.0
  %v1166 = vrcp.pop %v1165
  %v1167 = vmul.f32 1.0, %v1166
  %v1168 = vadd.f32 %v1131, %v524
  %1170 = vrot.lane.b32.xlu0 %v1168, 96
  %v1171 = vpop.permute.xlu0 %1170
  %v1173 = vmul.f32 %v1167, %v1171
  %1175 = vrot.lane.b32.xlu0 %v1173, 32
  %v1176 = vpop.permute.xlu0 %1175
  %v1178 = vadd.f32 %v986, %v1176
  %v1179 = vtanh.pop %v1178
  %v1180 = vsub.f32 1.0, %v1167
  %1182 = vrot.lane.b32.xlu0 %v1179, 112
  %v1183 = vpop.permute.xlu0 %1182
  %v1185 = vmul.f32 %v1180, %v1183
  %v1186 = vmul.f32 %v1167, %v974
  %v1187 = vadd.f32 %v1185, %v1186
  %1189 = vrot.lane.b32.xlu0 %v1160, 112
  %v1190 = vpop.permute.xlu0 %1189
  %s1192 = scalar_lea.vmem %s10, 24
  %1193 = vst.msk [vmem:[%s1192] sm:$0xff] %vm54, %v1190
  %s1194 = scalar_lea.vmem %s10, 32
  %1195 = vst.msk [vmem:[%s1194] sm:$0xff] %vm555, %v1187
  %s1196 = scalar_lea.vmem [#allocation2], 32
  %v1197 = vld [vmem:[%s1196] sm:$0xff]
  %s1198 = scalar_lea.vmem [#allocation3], 24
  %v1199 = vld [vmem:[%s1198] sm:$0xff]
  %v1200 = vsel %vm54, %v1190, 0
  %1202 = vmatprep.subr.mxu0 0.0
  %1203 = vmatpush1.msra.mxu0 %v315
  %1204 = vmatprep.subr.mxu0 0.0
  %1205 = vmatpush1.msra.mxu0 %v316
  %1206 = vmatprep.subr.mxu0 0.0
  %1207 = vmatpush1.msra.mxu0 0.0
  %1208 = vmatprep.subr.mxu0 0.0
  %1209 = vmatpush1.msra.mxu0 0.0
  %1210 = vmatprep.subr.mxu0 0.0
  %1211 = vmatpush1.msra.mxu0 0.0
  %1212 = vmatprep.subr.mxu0 0.0
  %1213 = vmatpush1.msra.mxu0 0.0
  %1214 = vmatprep.subr.mxu0 0.0
  %1215 = vmatpush1.msra.mxu0 0.0
  %1216 = vmatprep.subr.mxu0 0.0
  %1217 = vmatpush1.msra.mxu0 0.0
  %1218 = vmatprep.subr.mxu0 0.0
  %1219 = vmatpush1.msra.mxu0 0.0
  %1220 = vmatprep.subr.mxu0 0.0
  %1221 = vmatpush1.msra.mxu0 0.0
  %1222 = vmatprep.subr.mxu0 0.0
  %1223 = vmatpush1.msra.mxu0 0.0
  %1224 = vmatprep.subr.mxu0 0.0
  %1225 = vmatpush1.msra.mxu0 0.0
  %1226 = vmatprep.subr.mxu0 0.0
  %1227 = vmatpush1.msra.mxu0 0.0
  %1228 = vmatprep.subr.mxu0 0.0
  %1229 = vmatpush1.msra.mxu0 0.0
  %1230 = vmatprep.subr.mxu0 0.0
  %1231 = vmatpush1.msra.mxu0 0.0
  %1232 = vmatprep.subr.mxu0 0.0
  %1233 = vmatpush1.msra.mxu0 0.0
  %1234 = vmatprep.subr.mxu0 0.0
  %1235 = vmatpush1.msra.mxu0 0.0
  %1236 = vmatprep.subr.mxu0 0.0
  %1237 = vmatpush1.msra.mxu0 0.0
  %1238 = vmatprep.subr.mxu0 0.0
  %1239 = vmatpush1.msra.mxu0 0.0
  %1240 = vmatprep.subr.mxu0 0.0
  %1241 = vmatpush1.msra.mxu0 0.0
  %1242 = vmatprep.subr.mxu0 0.0
  %1243 = vmatpush1.msra.mxu0 0.0
  %1244 = vmatprep.subr.mxu0 0.0
  %1245 = vmatpush1.msra.mxu0 0.0
  %1246 = vmatprep.subr.mxu0 0.0
  %1247 = vmatpush1.msra.mxu0 0.0
  %1248 = vmatprep.subr.mxu0 0.0
  %1249 = vmatpush1.msra.mxu0 0.0
  %1250 = vmatprep.subr.mxu0 0.0
  %1251 = vmatpush1.msra.mxu0 0.0
  %1252 = vmatprep.subr.mxu0 0.0
  %1253 = vmatpush1.msra.mxu0 0.0
  %1254 = vmatprep.subr.mxu0 0.0
  %1255 = vmatpush1.msra.mxu0 0.0
  %1256 = vmatprep.subr.mxu0 0.0
  %1257 = vmatpush1.msra.mxu0 0.0
  %1258 = vmatprep.subr.mxu0 0.0
  %1259 = vmatpush1.msra.mxu0 0.0
  %1260 = vmatprep.subr.mxu0 0.0
  %1261 = vmatpush1.msra.mxu0 0.0
  %1262 = vmatprep.subr.mxu0 0.0
  %1263 = vmatpush1.msra.mxu0 0.0
  %1264 = vmatprep.subr.mxu0 0.0
  %1265 = vmatpush1.msra.mxu0 0.0
  %1266 = vmatprep.mubr.f32.mxu0 0.0
  %1267 = vmatmul.mubr.f32.gmra.mrb[0].mxu0 %v1200
  %v1268 = vpop.f32.mrb[0].mxu0
  %v1269 = vadd.f32 0.0, %v1268
  %v1270 = vpop.f32.mrb[0].mxu0
  %1271 = vdwg.mxu0
  %1273 = vrot.lane.b32.xlu0 %v1187, 112
  %v1274 = vpop.permute.xlu0 %1273
  %v1275 = vsel %vm54, %v1274, 0
  %1277 = vmatprep.subr.mxu0 0.0
  %1278 = vmatpush1.msra.mxu0 %v317
  %1279 = vmatprep.subr.mxu0 0.0
  %1280 = vmatpush1.msra.mxu0 %v318
  %1281 = vmatprep.subr.mxu0 0.0
  %1282 = vmatpush1.msra.mxu0 0.0
  %1283 = vmatprep.subr.mxu0 0.0
  %1284 = vmatpush1.msra.mxu0 0.0
  %1285 = vmatprep.subr.mxu0 0.0
  %1286 = vmatpush1.msra.mxu0 0.0
  %1287 = vmatprep.subr.mxu0 0.0
  %1288 = vmatpush1.msra.mxu0 0.0
  %1289 = vmatprep.subr.mxu0 0.0
  %1290 = vmatpush1.msra.mxu0 0.0
  %1291 = vmatprep.subr.mxu0 0.0
  %1292 = vmatpush1.msra.mxu0 0.0
  %1293 = vmatprep.subr.mxu0 0.0
  %1294 = vmatpush1.msra.mxu0 0.0
  %1295 = vmatprep.subr.mxu0 0.0
  %1296 = vmatpush1.msra.mxu0 0.0
  %1297 = vmatprep.subr.mxu0 0.0
  %1298 = vmatpush1.msra.mxu0 0.0
  %1299 = vmatprep.subr.mxu0 0.0
  %1300 = vmatpush1.msra.mxu0 0.0
  %1301 = vmatprep.subr.mxu0 0.0
  %1302 = vmatpush1.msra.mxu0 0.0
  %1303 = vmatprep.subr.mxu0 0.0
  %1304 = vmatpush1.msra.mxu0 0.0
  %1305 = vmatprep.subr.mxu0 0.0
  %1306 = vmatpush1.msra.mxu0 0.0
  %1307 = vmatprep.subr.mxu0 0.0
  %1308 = vmatpush1.msra.mxu0 0.0
  %1309 = vmatprep.subr.mxu0 0.0
  %1310 = vmatpush1.msra.mxu0 0.0
  %1311 = vmatprep.subr.mxu0 0.0
  %1312 = vmatpush1.msra.mxu0 0.0
  %1313 = vmatprep.subr.mxu0 0.0
  %1314 = vmatpush1.msra.mxu0 0.0
  %1315 = vmatprep.subr.mxu0 0.0
  %1316 = vmatpush1.msra.mxu0 0.0
  %1317 = vmatprep.subr.mxu0 0.0
  %1318 = vmatpush1.msra.mxu0 0.0
  %1319 = vmatprep.subr.mxu0 0.0
  %1320 = vmatpush1.msra.mxu0 0.0
  %1321 = vmatprep.subr.mxu0 0.0
  %1322 = vmatpush1.msra.mxu0 0.0
  %1323 = vmatprep.subr.mxu0 0.0
  %1324 = vmatpush1.msra.mxu0 0.0
  %1325 = vmatprep.subr.mxu0 0.0
  %1326 = vmatpush1.msra.mxu0 0.0
  %1327 = vmatprep.subr.mxu0 0.0
  %1328 = vmatpush1.msra.mxu0 0.0
  %1329 = vmatprep.subr.mxu0 0.0
  %1330 = vmatpush1.msra.mxu0 0.0
  %1331 = vmatprep.subr.mxu0 0.0
  %1332 = vmatpush1.msra.mxu0 0.0
  %1333 = vmatprep.subr.mxu0 0.0
  %1334 = vmatpush1.msra.mxu0 0.0
  %1335 = vmatprep.subr.mxu0 0.0
  %1336 = vmatpush1.msra.mxu0 0.0
  %1337 = vmatprep.subr.mxu0 0.0
  %1338 = vmatpush1.msra.mxu0 0.0
  %1339 = vmatprep.subr.mxu0 0.0
  %1340 = vmatpush1.msra.mxu0 0.0
  %1341 = vmatprep.mubr.f32.mxu0 0.0
  %1342 = vmatmul.mubr.f32.gmra.mrb[0].mxu0 %v1275
  %v1343 = vpop.f32.mrb[0].mxu0
  %v1344 = vadd.f32 0.0, %v1343
  %v1345 = vpop.f32.mrb[0].mxu0
  %1346 = vdwg.mxu0
  %v1347 = vadd.f32 %v1197, %v1269
  %v1348 = vxor.u32 %v1347, 2147483648
  %v1349 = vmul.f32 %v1348, 1.442695
  %v1350 = vpow.pop %v1349
  %v1351 = vadd.f32 %v1350, 1.0
  %v1352 = vrcp.pop %v1351
  %v1353 = vmul.f32 1.0, %v1352
  %v1354 = vadd.f32 %v1269, %v491
  %1356 = vrot.lane.b32.xlu0 %v1354, 96
  %v1357 = vpop.permute.xlu0 %1356
  %v1359 = vmul.f32 %v1353, %v1357
  %1361 = vrot.lane.b32.xlu0 %v1359, 32
  %v1362 = vpop.permute.xlu0 %1361
  %v1364 = vadd.f32 %v1197, %v1362
  %v1365 = vtanh.pop %v1364
  %v1366 = vsub.f32 1.0, %v1353
  %1368 = vrot.lane.b32.xlu0 %v1365, 112
  %v1369 = vpop.permute.xlu0 %1368
  %v1371 = vmul.f32 %v1366, %v1369
  %v1372 = vmul.f32 %v1353, %v1160
  %v1373 = vadd.f32 %v1371, %v1372
  %v1374 = vadd.f32 %v1199, %v1344
  %v1375 = vxor.u32 %v1374, 2147483648
  %v1376 = vmul.f32 %v1375, 1.442695
  %v1377 = vpow.pop %v1376
  %v1378 = vadd.f32 %v1377, 1.0
  %v1379 = vrcp.pop %v1378
  %v1380 = vmul.f32 1.0, %v1379
  %v1381 = vadd.f32 %v1344, %v524
  %1383 = vrot.lane.b32.xlu0 %v1381, 96
  %v1384 = vpop.permute.xlu0 %1383
  %v1386 = vmul.f32 %v1380, %v1384
  %1388 = vrot.lane.b32.xlu0 %v1386, 32
  %v1389 = vpop.permute.xlu0 %1388
  %v1391 = vadd.f32 %v1199, %v1389
  %v1392 = vtanh.pop %v1391
  %v1393 = vsub.f32 1.0, %v1380
  %1395 = vrot.lane.b32.xlu0 %v1392, 112
  %v1396 = vpop.permute.xlu0 %1395
  %v1398 = vmul.f32 %v1393, %v1396
  %v1399 = vmul.f32 %v1380, %v1187
  %v1400 = vadd.f32 %v1398, %v1399
  %1402 = vrot.lane.b32.xlu0 %v1373, 112
  %v1403 = vpop.permute.xlu0 %1402
  %1405 = vst.msk [vmem:[%s1194] sm:$0xff] %vm54, %v1403
  %1406 = vst.msk [vmem:[%s1192] sm:$0xff] %vm555, %v1400
  %s1407 = scalar_lea.vmem [#allocation2], 40
  %v1408 = vld [vmem:[%s1407] sm:$0xff]
  %s1409 = scalar_lea.vmem [#allocation3], 16
  %v1410 = vld [vmem:[%s1409] sm:$0xff]
  %v1411 = vsel %vm54, %v1403, 0
  %1413 = vmatprep.subr.mxu0 0.0
  %1414 = vmatpush1.msra.mxu0 %v315
  %1415 = vmatprep.subr.mxu0 0.0
  %1416 = vmatpush1.msra.mxu0 %v316
  %1417 = vmatprep.subr.mxu0 0.0
  %1418 = vmatpush1.msra.mxu0 0.0
  %1419 = vmatprep.subr.mxu0 0.0
  %1420 = vmatpush1.msra.mxu0 0.0
  %1421 = vmatprep.subr.mxu0 0.0
  %1422 = vmatpush1.msra.mxu0 0.0
  %1423 = vmatprep.subr.mxu0 0.0
  %1424 = vmatpush1.msra.mxu0 0.0
  %1425 = vmatprep.subr.mxu0 0.0
  %1426 = vmatpush1.msra.mxu0 0.0
  %1427 = vmatprep.subr.mxu0 0.0
  %1428 = vmatpush1.msra.mxu0 0.0
  %1429 = vmatprep.subr.mxu0 0.0
  %1430 = vmatpush1.msra.mxu0 0.0
  %1431 = vmatprep.subr.mxu0 0.0
  %1432 = vmatpush1.msra.mxu0 0.0
  %1433 = vmatprep.subr.mxu0 0.0
  %1434 = vmatpush1.msra.mxu0 0.0
  %1435 = vmatprep.subr.mxu0 0.0
  %1436 = vmatpush1.msra.mxu0 0.0
  %1437 = vmatprep.subr.mxu0 0.0
  %1438 = vmatpush1.msra.mxu0 0.0
  %1439 = vmatprep.subr.mxu0 0.0
  %1440 = vmatpush1.msra.mxu0 0.0
  %1441 = vmatprep.subr.mxu0 0.0
  %1442 = vmatpush1.msra.mxu0 0.0
  %1443 = vmatprep.subr.mxu0 0.0
  %1444 = vmatpush1.msra.mxu0 0.0
  %1445 = vmatprep.subr.mxu0 0.0
  %1446 = vmatpush1.msra.mxu0 0.0
  %1447 = vmatprep.subr.mxu0 0.0
  %1448 = vmatpush1.msra.mxu0 0.0
  %1449 = vmatprep.subr.mxu0 0.0
  %1450 = vmatpush1.msra.mxu0 0.0
  %1451 = vmatprep.subr.mxu0 0.0
  %1452 = vmatpush1.msra.mxu0 0.0
  %1453 = vmatprep.subr.mxu0 0.0
  %1454 = vmatpush1.msra.mxu0 0.0
  %1455 = vmatprep.subr.mxu0 0.0
  %1456 = vmatpush1.msra.mxu0 0.0
  %1457 = vmatprep.subr.mxu0 0.0
  %1458 = vmatpush1.msra.mxu0 0.0
  %1459 = vmatprep.subr.mxu0 0.0
  %1460 = vmatpush1.msra.mxu0 0.0
  %1461 = vmatprep.subr.mxu0 0.0
  %1462 = vmatpush1.msra.mxu0 0.0
  %1463 = vmatprep.subr.mxu0 0.0
  %1464 = vmatpush1.msra.mxu0 0.0
  %1465 = vmatprep.subr.mxu0 0.0
  %1466 = vmatpush1.msra.mxu0 0.0
  %1467 = vmatprep.subr.mxu0 0.0
  %1468 = vmatpush1.msra.mxu0 0.0
  %1469 = vmatprep.subr.mxu0 0.0
  %1470 = vmatpush1.msra.mxu0 0.0
  %1471 = vmatprep.subr.mxu0 0.0
  %1472 = vmatpush1.msra.mxu0 0.0
  %1473 = vmatprep.subr.mxu0 0.0
  %1474 = vmatpush1.msra.mxu0 0.0
  %1475 = vmatprep.subr.mxu0 0.0
  %1476 = vmatpush1.msra.mxu0 0.0
  %1477 = vmatprep.mubr.f32.mxu0 0.0
  %1478 = vmatmul.mubr.f32.gmra.mrb[0].mxu0 %v1411
  %v1479 = vpop.f32.mrb[0].mxu0
  %v1480 = vadd.f32 0.0, %v1479
  %v1481 = vpop.f32.mrb[0].mxu0
  %1482 = vdwg.mxu0
  %1484 = vrot.lane.b32.xlu0 %v1400, 112
  %v1485 = vpop.permute.xlu0 %1484
  %v1486 = vsel %vm54, %v1485, 0
  %1488 = vmatprep.subr.mxu0 0.0
  %1489 = vmatpush1.msra.mxu0 %v317
  %1490 = vmatprep.subr.mxu0 0.0
  %1491 = vmatpush1.msra.mxu0 %v318
  %1492 = vmatprep.subr.mxu0 0.0
  %1493 = vmatpush1.msra.mxu0 0.0
  %1494 = vmatprep.subr.mxu0 0.0
  %1495 = vmatpush1.msra.mxu0 0.0
  %1496 = vmatprep.subr.mxu0 0.0
  %1497 = vmatpush1.msra.mxu0 0.0
  %1498 = vmatprep.subr.mxu0 0.0
  %1499 = vmatpush1.msra.mxu0 0.0
  %1500 = vmatprep.subr.mxu0 0.0
  %1501 = vmatpush1.msra.mxu0 0.0
  %1502 = vmatprep.subr.mxu0 0.0
  %1503 = vmatpush1.msra.mxu0 0.0
  %1504 = vmatprep.subr.mxu0 0.0
  %1505 = vmatpush1.msra.mxu0 0.0
  %1506 = vmatprep.subr.mxu0 0.0
  %1507 = vmatpush1.msra.mxu0 0.0
  %1508 = vmatprep.subr.mxu0 0.0
  %1509 = vmatpush1.msra.mxu0 0.0
  %1510 = vmatprep.subr.mxu0 0.0
  %1511 = vmatpush1.msra.mxu0 0.0
  %1512 = vmatprep.subr.mxu0 0.0
  %1513 = vmatpush1.msra.mxu0 0.0
  %1514 = vmatprep.subr.mxu0 0.0
  %1515 = vmatpush1.msra.mxu0 0.0
  %1516 = vmatprep.subr.mxu0 0.0
  %1517 = vmatpush1.msra.mxu0 0.0
  %1518 = vmatprep.subr.mxu0 0.0
  %1519 = vmatpush1.msra.mxu0 0.0
  %1520 = vmatprep.subr.mxu0 0.0
  %1521 = vmatpush1.msra.mxu0 0.0
  %1522 = vmatprep.subr.mxu0 0.0
  %1523 = vmatpush1.msra.mxu0 0.0
  %1524 = vmatprep.subr.mxu0 0.0
  %1525 = vmatpush1.msra.mxu0 0.0
  %1526 = vmatprep.subr.mxu0 0.0
  %1527 = vmatpush1.msra.mxu0 0.0
  %1528 = vmatprep.subr.mxu0 0.0
  %1529 = vmatpush1.msra.mxu0 0.0
  %1530 = vmatprep.subr.mxu0 0.0
  %1531 = vmatpush1.msra.mxu0 0.0
  %1532 = vmatprep.subr.mxu0 0.0
  %1533 = vmatpush1.msra.mxu0 0.0
  %1534 = vmatprep.subr.mxu0 0.0
  %1535 = vmatpush1.msra.mxu0 0.0
  %1536 = vmatprep.subr.mxu0 0.0
  %1537 = vmatpush1.msra.mxu0 0.0
  %1538 = vmatprep.subr.mxu0 0.0
  %1539 = vmatpush1.msra.mxu0 0.0
  %1540 = vmatprep.subr.mxu0 0.0
  %1541 = vmatpush1.msra.mxu0 0.0
  %1542 = vmatprep.subr.mxu0 0.0
  %1543 = vmatpush1.msra.mxu0 0.0
  %1544 = vmatprep.subr.mxu0 0.0
  %1545 = vmatpush1.msra.mxu0 0.0
  %1546 = vmatprep.subr.mxu0 0.0
  %1547 = vmatpush1.msra.mxu0 0.0
  %1548 = vmatprep.subr.mxu0 0.0
  %1549 = vmatpush1.msra.mxu0 0.0
  %1550 = vmatprep.subr.mxu0 0.0
  %1551 = vmatpush1.msra.mxu0 0.0
  %1552 = vmatprep.mubr.f32.mxu0 0.0
  %1553 = vmatmul.mubr.f32.gmra.mrb[0].mxu0 %v1486
  %v1554 = vpop.f32.mrb[0].mxu0
  %v1555 = vadd.f32 0.0, %v1554
  %v1556 = vpop.f32.mrb[0].mxu0
  %1557 = vdwg.mxu0
  %v1558 = vadd.f32 %v1408, %v1480
  %v1559 = vxor.u32 %v1558, 2147483648
  %v1560 = vmul.f32 %v1559, 1.442695
  %v1561 = vpow.pop %v1560
  %v1562 = vadd.f32 %v1561, 1.0
  %v1563 = vrcp.pop %v1562
  %v1564 = vmul.f32 1.0, %v1563
  %v1565 = vadd.f32 %v1480, %v491
  %1567 = vrot.lane.b32.xlu0 %v1565, 96
  %v1568 = vpop.permute.xlu0 %1567
  %v1570 = vmul.f32 %v1564, %v1568
  %1572 = vrot.lane.b32.xlu0 %v1570, 32
  %v1573 = vpop.permute.xlu0 %1572
  %v1575 = vadd.f32 %v1408, %v1573
  %v1576 = vtanh.pop %v1575
  %v1577 = vsub.f32 1.0, %v1564
  %1579 = vrot.lane.b32.xlu0 %v1576, 112
  %v1580 = vpop.permute.xlu0 %1579
  %v1582 = vmul.f32 %v1577, %v1580
  %v1583 = vmul.f32 %v1564, %v1373
  %v1584 = vadd.f32 %v1582, %v1583
  %v1585 = vadd.f32 %v1410, %v1555
  %v1586 = vxor.u32 %v1585, 2147483648
  %v1587 = vmul.f32 %v1586, 1.442695
  %v1588 = vpow.pop %v1587
  %v1589 = vadd.f32 %v1588, 1.0
  %v1590 = vrcp.pop %v1589
  %v1591 = vmul.f32 1.0, %v1590
  %v1592 = vadd.f32 %v1555, %v524
  %1594 = vrot.lane.b32.xlu0 %v1592, 96
  %v1595 = vpop.permute.xlu0 %1594
  %v1597 = vmul.f32 %v1591, %v1595
  %1599 = vrot.lane.b32.xlu0 %v1597, 32
  %v1600 = vpop.permute.xlu0 %1599
  %v1602 = vadd.f32 %v1410, %v1600
  %v1603 = vtanh.pop %v1602
  %v1604 = vsub.f32 1.0, %v1591
  %1606 = vrot.lane.b32.xlu0 %v1603, 112
  %v1607 = vpop.permute.xlu0 %1606
  %v1609 = vmul.f32 %v1604, %v1607
  %v1610 = vmul.f32 %v1591, %v1400
  %v1611 = vadd.f32 %v1609, %v1610
  %1613 = vrot.lane.b32.xlu0 %v1584, 112
  %v1614 = vpop.permute.xlu0 %1613
  %1616 = vst.msk [vmem:[%s981] sm:$0xff] %vm54, %v1614
  %1617 = vst.msk [vmem:[%s979] sm:$0xff] %vm555, %v1611
  %s1618 = scalar_lea.vmem [#allocation2], 48
  %v1619 = vld [vmem:[%s1618] sm:$0xff]
  %s1620 = scalar_lea.vmem [#allocation3], 8
  %v1621 = vld [vmem:[%s1620] sm:$0xff]
  %v1622 = vsel %vm54, %v1614, 0
  %1624 = vmatprep.subr.mxu0 0.0
  %1625 = vmatpush1.msra.mxu0 %v315
  %1626 = vmatprep.subr.mxu0 0.0
  %1627 = vmatpush1.msra.mxu0 %v316
  %1628 = vmatprep.subr.mxu0 0.0
  %1629 = vmatpush1.msra.mxu0 0.0
  %1630 = vmatprep.subr.mxu0 0.0
  %1631 = vmatpush1.msra.mxu0 0.0
  %1632 = vmatprep.subr.mxu0 0.0
  %1633 = vmatpush1.msra.mxu0 0.0
  %1634 = vmatprep.subr.mxu0 0.0
  %1635 = vmatpush1.msra.mxu0 0.0
  %1636 = vmatprep.subr.mxu0 0.0
  %1637 = vmatpush1.msra.mxu0 0.0
  %1638 = vmatprep.subr.mxu0 0.0
  %1639 = vmatpush1.msra.mxu0 0.0
  %1640 = vmatprep.subr.mxu0 0.0
  %1641 = vmatpush1.msra.mxu0 0.0
  %1642 = vmatprep.subr.mxu0 0.0
  %1643 = vmatpush1.msra.mxu0 0.0
  %1644 = vmatprep.subr.mxu0 0.0
  %1645 = vmatpush1.msra.mxu0 0.0
  %1646 = vmatprep.subr.mxu0 0.0
  %1647 = vmatpush1.msra.mxu0 0.0
  %1648 = vmatprep.subr.mxu0 0.0
  %1649 = vmatpush1.msra.mxu0 0.0
  %1650 = vmatprep.subr.mxu0 0.0
  %1651 = vmatpush1.msra.mxu0 0.0
  %1652 = vmatprep.subr.mxu0 0.0
  %1653 = vmatpush1.msra.mxu0 0.0
  %1654 = vmatprep.subr.mxu0 0.0
  %1655 = vmatpush1.msra.mxu0 0.0
  %1656 = vmatprep.subr.mxu0 0.0
  %1657 = vmatpush1.msra.mxu0 0.0
  %1658 = vmatprep.subr.mxu0 0.0
  %1659 = vmatpush1.msra.mxu0 0.0
  %1660 = vmatprep.subr.mxu0 0.0
  %1661 = vmatpush1.msra.mxu0 0.0
  %1662 = vmatprep.subr.mxu0 0.0
  %1663 = vmatpush1.msra.mxu0 0.0
  %1664 = vmatprep.subr.mxu0 0.0
  %1665 = vmatpush1.msra.mxu0 0.0
  %1666 = vmatprep.subr.mxu0 0.0
  %1667 = vmatpush1.msra.mxu0 0.0
  %1668 = vmatprep.subr.mxu0 0.0
  %1669 = vmatpush1.msra.mxu0 0.0
  %1670 = vmatprep.subr.mxu0 0.0
  %1671 = vmatpush1.msra.mxu0 0.0
  %1672 = vmatprep.subr.mxu0 0.0
  %1673 = vmatpush1.msra.mxu0 0.0
  %1674 = vmatprep.subr.mxu0 0.0
  %1675 = vmatpush1.msra.mxu0 0.0
  %1676 = vmatprep.subr.mxu0 0.0
  %1677 = vmatpush1.msra.mxu0 0.0
  %1678 = vmatprep.subr.mxu0 0.0
  %1679 = vmatpush1.msra.mxu0 0.0
  %1680 = vmatprep.subr.mxu0 0.0
  %1681 = vmatpush1.msra.mxu0 0.0
  %1682 = vmatprep.subr.mxu0 0.0
  %1683 = vmatpush1.msra.mxu0 0.0
  %1684 = vmatprep.subr.mxu0 0.0
  %1685 = vmatpush1.msra.mxu0 0.0
  %1686 = vmatprep.subr.mxu0 0.0
  %1687 = vmatpush1.msra.mxu0 0.0
  %1688 = vmatprep.mubr.f32.mxu0 0.0
  %1689 = vmatmul.mubr.f32.gmra.mrb[0].mxu0 %v1622
  %v1690 = vpop.f32.mrb[0].mxu0
  %v1691 = vadd.f32 0.0, %v1690
  %v1692 = vpop.f32.mrb[0].mxu0
  %1693 = vdwg.mxu0
  %1695 = vrot.lane.b32.xlu0 %v1611, 112
  %v1696 = vpop.permute.xlu0 %1695
  %v1697 = vsel %vm54, %v1696, 0
  %1699 = vmatprep.subr.mxu0 0.0
  %1700 = vmatpush1.msra.mxu0 %v317
  %1701 = vmatprep.subr.mxu0 0.0
  %1702 = vmatpush1.msra.mxu0 %v318
  %1703 = vmatprep.subr.mxu0 0.0
  %1704 = vmatpush1.msra.mxu0 0.0
  %1705 = vmatprep.subr.mxu0 0.0
  %1706 = vmatpush1.msra.mxu0 0.0
  %1707 = vmatprep.subr.mxu0 0.0
  %1708 = vmatpush1.msra.mxu0 0.0
  %1709 = vmatprep.subr.mxu0 0.0
  %1710 = vmatpush1.msra.mxu0 0.0
  %1711 = vmatprep.subr.mxu0 0.0
  %1712 = vmatpush1.msra.mxu0 0.0
  %1713 = vmatprep.subr.mxu0 0.0
  %1714 = vmatpush1.msra.mxu0 0.0
  %1715 = vmatprep.subr.mxu0 0.0
  %1716 = vmatpush1.msra.mxu0 0.0
  %1717 = vmatprep.subr.mxu0 0.0
  %1718 = vmatpush1.msra.mxu0 0.0
  %1719 = vmatprep.subr.mxu0 0.0
  %1720 = vmatpush1.msra.mxu0 0.0
  %1721 = vmatprep.subr.mxu0 0.0
  %1722 = vmatpush1.msra.mxu0 0.0
  %1723 = vmatprep.subr.mxu0 0.0
  %1724 = vmatpush1.msra.mxu0 0.0
  %1725 = vmatprep.subr.mxu0 0.0
  %1726 = vmatpush1.msra.mxu0 0.0
  %1727 = vmatprep.subr.mxu0 0.0
  %1728 = vmatpush1.msra.mxu0 0.0
  %1729 = vmatprep.subr.mxu0 0.0
  %1730 = vmatpush1.msra.mxu0 0.0
  %1731 = vmatprep.subr.mxu0 0.0
  %1732 = vmatpush1.msra.mxu0 0.0
  %1733 = vmatprep.subr.mxu0 0.0
  %1734 = vmatpush1.msra.mxu0 0.0
  %1735 = vmatprep.subr.mxu0 0.0
  %1736 = vmatpush1.msra.mxu0 0.0
  %1737 = vmatprep.subr.mxu0 0.0
  %1738 = vmatpush1.msra.mxu0 0.0
  %1739 = vmatprep.subr.mxu0 0.0
  %1740 = vmatpush1.msra.mxu0 0.0
  %1741 = vmatprep.subr.mxu0 0.0
  %1742 = vmatpush1.msra.mxu0 0.0
  %1743 = vmatprep.subr.mxu0 0.0
  %1744 = vmatpush1.msra.mxu0 0.0
  %1745 = vmatprep.subr.mxu0 0.0
  %1746 = vmatpush1.msra.mxu0 0.0
  %1747 = vmatprep.subr.mxu0 0.0
  %1748 = vmatpush1.msra.mxu0 0.0
  %1749 = vmatprep.subr.mxu0 0.0
  %1750 = vmatpush1.msra.mxu0 0.0
  %1751 = vmatprep.subr.mxu0 0.0
  %1752 = vmatpush1.msra.mxu0 0.0
  %1753 = vmatprep.subr.mxu0 0.0
  %1754 = vmatpush1.msra.mxu0 0.0
  %1755 = vmatprep.subr.mxu0 0.0
  %1756 = vmatpush1.msra.mxu0 0.0
  %1757 = vmatprep.subr.mxu0 0.0
  %1758 = vmatpush1.msra.mxu0 0.0
  %1759 = vmatprep.subr.mxu0 0.0
  %1760 = vmatpush1.msra.mxu0 0.0
  %1761 = vmatprep.subr.mxu0 0.0
  %1762 = vmatpush1.msra.mxu0 0.0
  %1763 = vmatprep.mubr.f32.mxu0 0.0
  %1764 = vmatmul.mubr.f32.gmra.mrb[0].mxu0 %v1697
  %v1765 = vpop.f32.mrb[0].mxu0
  %v1766 = vadd.f32 0.0, %v1765
  %v1767 = vpop.f32.mrb[0].mxu0
  %1768 = vdwg.mxu0
  %v1769 = vadd.f32 %v1619, %v1691
  %v1770 = vxor.u32 %v1769, 2147483648
  %v1771 = vmul.f32 %v1770, 1.442695
  %v1772 = vpow.pop %v1771
  %v1773 = vadd.f32 %v1772, 1.0
  %v1774 = vrcp.pop %v1773
  %v1775 = vmul.f32 1.0, %v1774
  %v1776 = vadd.f32 %v1691, %v491
  %1778 = vrot.lane.b32.xlu0 %v1776, 96
  %v1779 = vpop.permute.xlu0 %1778
  %v1781 = vmul.f32 %v1775, %v1779
  %1783 = vrot.lane.b32.xlu0 %v1781, 32
  %v1784 = vpop.permute.xlu0 %1783
  %v1786 = vadd.f32 %v1619, %v1784
  %v1787 = vtanh.pop %v1786
  %v1788 = vsub.f32 1.0, %v1775
  %1790 = vrot.lane.b32.xlu0 %v1787, 112
  %v1791 = vpop.permute.xlu0 %1790
  %v1793 = vmul.f32 %v1788, %v1791
  %v1794 = vmul.f32 %v1775, %v1584
  %v1795 = vadd.f32 %v1793, %v1794
  %v1796 = vadd.f32 %v1621, %v1766
  %v1797 = vxor.u32 %v1796, 2147483648
  %v1798 = vmul.f32 %v1797, 1.442695
  %v1799 = vpow.pop %v1798
  %v1800 = vadd.f32 %v1799, 1.0
  %v1801 = vrcp.pop %v1800
  %v1802 = vmul.f32 1.0, %v1801
  %v1803 = vadd.f32 %v1766, %v524
  %1805 = vrot.lane.b32.xlu0 %v1803, 96
  %v1806 = vpop.permute.xlu0 %1805
  %v1808 = vmul.f32 %v1802, %v1806
  %1810 = vrot.lane.b32.xlu0 %v1808, 32
  %v1811 = vpop.permute.xlu0 %1810
  %v1813 = vadd.f32 %v1621, %v1811
  %v1814 = vtanh.pop %v1813
  %v1815 = vsub.f32 1.0, %v1802
  %1817 = vrot.lane.b32.xlu0 %v1814, 112
  %v1818 = vpop.permute.xlu0 %1817
  %v1820 = vmul.f32 %v1815, %v1818
  %v1821 = vmul.f32 %v1802, %v1611
  %v1822 = vadd.f32 %v1820, %v1821
  %1824 = vrot.lane.b32.xlu0 %v1795, 112
  %v1825 = vpop.permute.xlu0 %1824
  %1827 = vst.msk [vmem:[%s768] sm:$0xff] %vm54, %v1825
  %1828 = vst.msk [vmem:[%s766] sm:$0xff] %vm555, %v1822
  %s1829 = scalar_lea.vmem [#allocation2], 56
  %v1830 = vld [vmem:[%s1829] sm:$0xff]
  %v1831 = vld [vmem:[#allocation3] sm:$0xff]
  %v1832 = vsel %vm54, %v1825, 0
  %1834 = vmatprep.subr.mxu0 0.0
  %1835 = vmatpush1.msra.mxu0 %v315
  %1836 = vmatprep.subr.mxu0 0.0
  %1837 = vmatpush1.msra.mxu0 %v316
  %1838 = vmatprep.subr.mxu0 0.0
  %1839 = vmatpush1.msra.mxu0 0.0
  %1840 = vmatprep.subr.mxu0 0.0
  %1841 = vmatpush1.msra.mxu0 0.0
  %1842 = vmatprep.subr.mxu0 0.0
  %1843 = vmatpush1.msra.mxu0 0.0
  %1844 = vmatprep.subr.mxu0 0.0
  %1845 = vmatpush1.msra.mxu0 0.0
  %1846 = vmatprep.subr.mxu0 0.0
  %1847 = vmatpush1.msra.mxu0 0.0
  %1848 = vmatprep.subr.mxu0 0.0
  %1849 = vmatpush1.msra.mxu0 0.0
  %1850 = vmatprep.subr.mxu0 0.0
  %1851 = vmatpush1.msra.mxu0 0.0
  %1852 = vmatprep.subr.mxu0 0.0
  %1853 = vmatpush1.msra.mxu0 0.0
  %1854 = vmatprep.subr.mxu0 0.0
  %1855 = vmatpush1.msra.mxu0 0.0
  %1856 = vmatprep.subr.mxu0 0.0
  %1857 = vmatpush1.msra.mxu0 0.0
  %1858 = vmatprep.subr.mxu0 0.0
  %1859 = vmatpush1.msra.mxu0 0.0
  %1860 = vmatprep.subr.mxu0 0.0
  %1861 = vmatpush1.msra.mxu0 0.0
  %1862 = vmatprep.subr.mxu0 0.0
  %1863 = vmatpush1.msra.mxu0 0.0
  %1864 = vmatprep.subr.mxu0 0.0
  %1865 = vmatpush1.msra.mxu0 0.0
  %1866 = vmatprep.subr.mxu0 0.0
  %1867 = vmatpush1.msra.mxu0 0.0
  %1868 = vmatprep.subr.mxu0 0.0
  %1869 = vmatpush1.msra.mxu0 0.0
  %1870 = vmatprep.subr.mxu0 0.0
  %1871 = vmatpush1.msra.mxu0 0.0
  %1872 = vmatprep.subr.mxu0 0.0
  %1873 = vmatpush1.msra.mxu0 0.0
  %1874 = vmatprep.subr.mxu0 0.0
  %1875 = vmatpush1.msra.mxu0 0.0
  %1876 = vmatprep.subr.mxu0 0.0
  %1877 = vmatpush1.msra.mxu0 0.0
  %1878 = vmatprep.subr.mxu0 0.0
  %1879 = vmatpush1.msra.mxu0 0.0
  %1880 = vmatprep.subr.mxu0 0.0
  %1881 = vmatpush1.msra.mxu0 0.0
  %1882 = vmatprep.subr.mxu0 0.0
  %1883 = vmatpush1.msra.mxu0 0.0
  %1884 = vmatprep.subr.mxu0 0.0
  %1885 = vmatpush1.msra.mxu0 0.0
  %1886 = vmatprep.subr.mxu0 0.0
  %1887 = vmatpush1.msra.mxu0 0.0
  %1888 = vmatprep.subr.mxu0 0.0
  %1889 = vmatpush1.msra.mxu0 0.0
  %1890 = vmatprep.subr.mxu0 0.0
  %1891 = vmatpush1.msra.mxu0 0.0
  %1892 = vmatprep.subr.mxu0 0.0
  %1893 = vmatpush1.msra.mxu0 0.0
  %1894 = vmatprep.subr.mxu0 0.0
  %1895 = vmatpush1.msra.mxu0 0.0
  %1896 = vmatprep.subr.mxu0 0.0
  %1897 = vmatpush1.msra.mxu0 0.0
  %1898 = vmatprep.mubr.f32.mxu0 0.0
  %1899 = vmatmul.mubr.f32.gmra.mrb[0].mxu0 %v1832
  %v1900 = vpop.f32.mrb[0].mxu0
  %v1901 = vadd.f32 0.0, %v1900
  %v1902 = vpop.f32.mrb[0].mxu0
  %1903 = vdwg.mxu0
  %1905 = vrot.lane.b32.xlu0 %v1822, 112
  %v1906 = vpop.permute.xlu0 %1905
  %v1907 = vsel %vm54, %v1906, 0
  %1909 = vmatprep.subr.mxu0 0.0
  %1910 = vmatpush1.msra.mxu0 %v317
  %1911 = vmatprep.subr.mxu0 0.0
  %1912 = vmatpush1.msra.mxu0 %v318
  %1913 = vmatprep.subr.mxu0 0.0
  %1914 = vmatpush1.msra.mxu0 0.0
  %1915 = vmatprep.subr.mxu0 0.0
  %1916 = vmatpush1.msra.mxu0 0.0
  %1917 = vmatprep.subr.mxu0 0.0
  %1918 = vmatpush1.msra.mxu0 0.0
  %1919 = vmatprep.subr.mxu0 0.0
  %1920 = vmatpush1.msra.mxu0 0.0
  %1921 = vmatprep.subr.mxu0 0.0
  %1922 = vmatpush1.msra.mxu0 0.0
  %1923 = vmatprep.subr.mxu0 0.0
  %1924 = vmatpush1.msra.mxu0 0.0
  %1925 = vmatprep.subr.mxu0 0.0
  %1926 = vmatpush1.msra.mxu0 0.0
  %1927 = vmatprep.subr.mxu0 0.0
  %1928 = vmatpush1.msra.mxu0 0.0
  %1929 = vmatprep.subr.mxu0 0.0
  %1930 = vmatpush1.msra.mxu0 0.0
  %1931 = vmatprep.subr.mxu0 0.0
  %1932 = vmatpush1.msra.mxu0 0.0
  %1933 = vmatprep.subr.mxu0 0.0
  %1934 = vmatpush1.msra.mxu0 0.0
  %1935 = vmatprep.subr.mxu0 0.0
  %1936 = vmatpush1.msra.mxu0 0.0
  %1937 = vmatprep.subr.mxu0 0.0
  %1938 = vmatpush1.msra.mxu0 0.0
  %1939 = vmatprep.subr.mxu0 0.0
  %1940 = vmatpush1.msra.mxu0 0.0
  %1941 = vmatprep.subr.mxu0 0.0
  %1942 = vmatpush1.msra.mxu0 0.0
  %1943 = vmatprep.subr.mxu0 0.0
  %1944 = vmatpush1.msra.mxu0 0.0
  %1945 = vmatprep.subr.mxu0 0.0
  %1946 = vmatpush1.msra.mxu0 0.0
  %1947 = vmatprep.subr.mxu0 0.0
  %1948 = vmatpush1.msra.mxu0 0.0
  %1949 = vmatprep.subr.mxu0 0.0
  %1950 = vmatpush1.msra.mxu0 0.0
  %1951 = vmatprep.subr.mxu0 0.0
  %1952 = vmatpush1.msra.mxu0 0.0
  %1953 = vmatprep.subr.mxu0 0.0
  %1954 = vmatpush1.msra.mxu0 0.0
  %1955 = vmatprep.subr.mxu0 0.0
  %1956 = vmatpush1.msra.mxu0 0.0
  %1957 = vmatprep.subr.mxu0 0.0
  %1958 = vmatpush1.msra.mxu0 0.0
  %1959 = vmatprep.subr.mxu0 0.0
  %1960 = vmatpush1.msra.mxu0 0.0
  %1961 = vmatprep.subr.mxu0 0.0
  %1962 = vmatpush1.msra.mxu0 0.0
  %1963 = vmatprep.subr.mxu0 0.0
  %1964 = vmatpush1.msra.mxu0 0.0
  %1965 = vmatprep.subr.mxu0 0.0
  %1966 = vmatpush1.msra.mxu0 0.0
  %1967 = vmatprep.subr.mxu0 0.0
  %1968 = vmatpush1.msra.mxu0 0.0
  %1969 = vmatprep.subr.mxu0 0.0
  %1970 = vmatpush1.msra.mxu0 0.0
  %1971 = vmatprep.subr.mxu0 0.0
  %1972 = vmatpush1.msra.mxu0 0.0
  %1973 = vmatprep.mubr.f32.mxu0 0.0
  %1974 = vmatmul.mubr.f32.gmra.mrb[0].mxu0 %v1907
  %v1975 = vpop.f32.mrb[0].mxu0
  %v1976 = vadd.f32 0.0, %v1975
  %v1977 = vpop.f32.mrb[0].mxu0
  %1978 = vdwg.mxu0
  %v1979 = vadd.f32 %v1830, %v1901
  %v1980 = vxor.u32 %v1979, 2147483648
  %v1981 = vmul.f32 %v1980, 1.442695
  %v1982 = vpow.pop %v1981
  %v1983 = vadd.f32 %v1982, 1.0
  %v1984 = vrcp.pop %v1983
  %v1985 = vmul.f32 1.0, %v1984
  %v1986 = vadd.f32 %v1901, %v491
  %1988 = vrot.lane.b32.xlu0 %v1986, 96
  %v1989 = vpop.permute.xlu0 %1988
  %v1991 = vmul.f32 %v1985, %v1989
  %1993 = vrot.lane.b32.xlu0 %v1991, 32
  %v1994 = vpop.permute.xlu0 %1993
  %v1996 = vadd.f32 %v1830, %v1994
  %v1997 = vtanh.pop %v1996
  %v1998 = vsub.f32 1.0, %v1985
  %2000 = vrot.lane.b32.xlu0 %v1997, 112
  %v2001 = vpop.permute.xlu0 %2000
  %v2003 = vmul.f32 %v1998, %v2001
  %v2004 = vmul.f32 %v1985, %v1795
  %v2005 = vadd.f32 %v2003, %v2004
  %v2006 = vadd.f32 %v1831, %v1976
  %v2007 = vxor.u32 %v2006, 2147483648
  %v2008 = vmul.f32 %v2007, 1.442695
  %v2009 = vpow.pop %v2008
  %v2010 = vadd.f32 %v2009, 1.0
  %v2011 = vrcp.pop %v2010
  %v2012 = vmul.f32 1.0, %v2011
  %v2013 = vadd.f32 %v1976, %v524
  %2015 = vrot.lane.b32.xlu0 %v2013, 96
  %v2016 = vpop.permute.xlu0 %2015
  %v2018 = vmul.f32 %v2012, %v2016
  %2020 = vrot.lane.b32.xlu0 %v2018, 32
  %v2021 = vpop.permute.xlu0 %2020
  %v2023 = vadd.f32 %v1831, %v2021
  %v2024 = vtanh.pop %v2023
  %v2025 = vsub.f32 1.0, %v2012
  %2027 = vrot.lane.b32.xlu0 %v2024, 112
  %v2028 = vpop.permute.xlu0 %2027
  %v2030 = vmul.f32 %v2025, %v2028
  %v2031 = vmul.f32 %v2012, %v1822
  %v2032 = vadd.f32 %v2030, %v2031
  %2034 = vrot.lane.b32.xlu0 %v2005, 112
  %v2035 = vpop.permute.xlu0 %2034
  %2037 = vst.msk [vmem:[%s554] sm:$0xff] %vm54, %v2035
  %2038 = vst.msk [vmem:[%s10] sm:$0xff] %vm555, %v2032
  %2039 = vst.msk [vmem:[%s11] sm:$0xff] %vm54, %v2035
  %2041 = vrot.lane.b32.xlu0 %v2032, 112
  %v2042 = vpop.permute.xlu0 %2041
  %s2044 = scalar_lea.vmem %s11, 8
  %2045 = vst.msk [vmem:[%s2044] sm:$0xff] %vm54, %v2042
  // Predicated region
  $region42: #{encoder_forward.1} parent=0 // pred_check
    _
  $region43: #{encoder_forward.1} parent=0 // pred_check_branch
    %2047 = sbr.rel (0) target = $region45
  $region44: #{encoder_forward.1} parent=0 // pred_region
    _
  $region45: #{encoder_forward.1} parent=0 // pred_fallthru
    _
  // Predicated region
  $region46: #{encoder_forward.1} parent=0 // pred_check
    _
  $region47: #{encoder_forward.1} parent=0 // pred_check_branch
    %2049 = sbr.rel (0) target = $region49
  $region48: #{encoder_forward.1} parent=0 // pred_region
    _
  $region49: #{encoder_forward.1} parent=0 // pred_fallthru
    _
  // Predicated region
  $region50: #{encoder_forward.1} parent=0 // pred_check
    _
  $region51: #{encoder_forward.1} parent=0 // pred_check_branch
    %2051 = sbr.rel (0) target = $region53
  $region52: #{encoder_forward.1} parent=0 // pred_region
    _
  $region53: #{encoder_forward.1} parent=0 // pred_fallthru
    _
  // Predicated region
  $region54: #{encoder_forward.1} parent=0 // pred_check
    _
  $region55: #{encoder_forward.1} parent=0 // pred_check_branch
    %2053 = sbr.rel (0) target = $region57
  $region56: #{encoder_forward.1} parent=0 // pred_region
    _
  $region57: #{encoder_forward.1} parent=0 // pred_fallthru
    _

</llo_original>
